<compile_context>
chip_gen: v5e
topology: v5e:2x2
jax: 0.10.0
libtpu: 0.0.40
codegen_flags: <defaults>
</compile_context>

<pallas_src>
import jax
import jax.numpy as jnp
from jax import lax
from jax.experimental import pallas as pl
from jax.experimental.pallas import tpu as pltpu


def _round_up(x, m):
    return ((x + m - 1) // m) * m


def _vmem_limit_bytes():
    """~85% of physical VMEM (v5e/v6e ~108 MiB, v7x ~54 MiB); safe fallback."""
    try:
        cap = getattr(pltpu.get_tpu_info(), "vmem_capacity_bytes", None)
        if cap:
            return int(cap * 0.85)
    except Exception:
        pass
    return 48 * 1024 * 1024


# --------------------------------------------------------------------------- #
# Kernel A: Elman recurrence (runs once over the whole sequence).
# --------------------------------------------------------------------------- #
def _recurrence_kernel(emb_ref, wih_ref, whh_ref, brnn_ref, hs_out_ref,
                       h_carry, pre_ref):
    """One T-tile.

    emb_ref   : (tile_t*Bp, Ep) bf16  time-major flattened embedding tile
    wih_ref   : (Ep, Hp)        bf16  input->hidden (pre-transposed vs torch)
    whh_ref   : (Hp, Hp)        f32   hidden->hidden (f32: no per-step requant)
    brnn_ref  : (1, Hp)         f32   b_ih + b_hh
    hs_out_ref: (tile_t*Bp, Hp) bf16  hidden-state slab tile (output)
    h_carry   : (Bp, Hp)        f32   scratch: hidden state carried across T tiles
    pre_ref   : (tile_t*Bp, Hp) f32   scratch: pre-activations / hidden states
    """
    t_idx = pl.program_id(0)
    Bp, _ = h_carry.shape
    tile_t = pre_ref.shape[0] // Bp

    @pl.when(t_idx == 0)
    def _():
        h_carry[...] = jnp.zeros_like(h_carry)

    # Batched input projection: one MXU GEMM for the whole T tile.
    pre_ref[...] = (jnp.dot(emb_ref[...], wih_ref[...],
                            preferred_element_type=jnp.float32)
                    + brnn_ref[...])                     # (tile_t*Bp, Hp) f32

    whh = whh_ref[...]                                   # (Hp, Hp) f32

    # Serial chain: only h @ Whh + tanh stays on the critical path.
    # TODO(synk): if the bundle dump shows Whh being re-pushed every step,
    # drive the MXU with pltpu.matmul_push_rhs / matmul_acc_lhs to keep Whh staged.
    def step(i, h):
        row = pl.multiple_of(i * Bp, Bp)
        pre = pre_ref[pl.ds(row, Bp), :] + jnp.dot(
            h, whh, preferred_element_type=jnp.float32)
        h_new = jnp.tanh(pre)                            # (Bp, Hp) f32
        pre_ref[pl.ds(row, Bp), :] = h_new
        return h_new

    h_last = lax.fori_loop(0, tile_t, step, h_carry[...], unroll=True)
    h_carry[...] = h_last

    # One lane-dense bf16 store of the whole tile.
    hs_out_ref[...] = pre_ref[...].astype(hs_out_ref.dtype)


# --------------------------------------------------------------------------- #
# Kernel B: output projection  hs @ Wout + b  (plain tiled GEMM, fully parallel).
# --------------------------------------------------------------------------- #
def _output_proj_kernel(hs_ref, wout_ref, bout_ref, out_ref):
    """hs_ref: (tile_m, Hp) bf16, wout_ref: (Hp, tile_v) bf16,
    bout_ref: (1, tile_v) f32, out_ref: (tile_m, tile_v) bf16."""
    out_ref[...] = (jnp.dot(hs_ref[...], wout_ref[...],
                            preferred_element_type=jnp.float32)
                    + bout_ref[...]).astype(out_ref.dtype)


# --------------------------------------------------------------------------- #
# pallas_call wrappers
# --------------------------------------------------------------------------- #
def _run_recurrence(emb_flat, wih_p, whh_p, brnn_p, *, Bp, tile_t,
                    single_buffer_weights, vmem_limit):
    rows, Ep = emb_flat.shape
    Hp = whh_p.shape[0]
    n_t = rows // (tile_t * Bp)

    const_kw = {"pipeline_mode": pl.Buffered(1)} if single_buffer_weights else {}

    grid_spec = pltpu.PrefetchScalarGridSpec(
        num_scalar_prefetch=0,
        grid=(n_t,),
        in_specs=[
            pl.BlockSpec((tile_t * Bp, Ep), lambda t: (t, 0)),            # emb tile
            pl.BlockSpec((Ep, Hp), lambda t: (0, 0), **const_kw),         # wih
            pl.BlockSpec((Hp, Hp), lambda t: (0, 0), **const_kw),         # whh
            pl.BlockSpec((1, Hp), lambda t: (0, 0), **const_kw),          # b_rnn
        ],
        out_specs=pl.BlockSpec((tile_t * Bp, Hp), lambda t: (t, 0)),
        scratch_shapes=[
            pltpu.VMEM((Bp, Hp), jnp.float32),            # hidden-state carry
            pltpu.VMEM((tile_t * Bp, Hp), jnp.float32),   # per-tile pre-acts
        ],
    )
    return pl.pallas_call(
        _recurrence_kernel,
        out_shape=jax.ShapeDtypeStruct((rows, Hp), jnp.bfloat16),
        grid_spec=grid_spec,
        compiler_params=pltpu.CompilerParams(
            dimension_semantics=("arbitrary",),
            vmem_limit_bytes=vmem_limit,
        ),
    )(emb_flat, wih_p, whh_p, brnn_p)


def _run_output_proj(hs_flat, wout_p, bout_p, *, tile_m, tile_v, vmem_limit):
    rows, Hp = hs_flat.shape
    Vp = wout_p.shape[1]
    n_m = rows // tile_m
    n_v = Vp // tile_v

    grid_spec = pltpu.PrefetchScalarGridSpec(
        num_scalar_prefetch=0,
        grid=(n_m, n_v),
        in_specs=[
            pl.BlockSpec((tile_m, Hp), lambda m, v: (m, 0)),
            pl.BlockSpec((Hp, tile_v), lambda m, v: (0, v)),
            pl.BlockSpec((1, tile_v), lambda m, v: (0, v)),
        ],
        out_specs=pl.BlockSpec((tile_m, tile_v), lambda m, v: (m, v)),
    )
    return pl.pallas_call(
        _output_proj_kernel,
        out_shape=jax.ShapeDtypeStruct((rows, Vp), jnp.bfloat16),
        grid_spec=grid_spec,
        compiler_params=pltpu.CompilerParams(
            dimension_semantics=("parallel", "parallel"),
            vmem_limit_bytes=vmem_limit,
        ),
    )(hs_flat, wout_p, bout_p)


# --------------------------------------------------------------------------- #
# Full forward pass matching LM_RNN.forward
# --------------------------------------------------------------------------- #
def lm_rnn_pallas(tokens, params, *, tile_t=64, tile_v=2048, pad_index=0):
    """tokens: (B, T) int32 token ids -> (B, V, T) float32 logits."""
    emb_table = params["emb_table"]          # (V, E)
    wih = params["wih"]                      # (E, H)
    whh = params["whh"]                      # (H, H)
    bih = params["bih"]                      # (1, H)
    bhh = params["bhh"]                      # (1, H)
    wout = params["wout"]                    # (H, V)
    bout = params["bout"]                    # (1, V)

    B, T = tokens.shape
    E = emb_table.shape[1]
    H = whh.shape[0]
    V = wout.shape[1]
    f32, bf16 = jnp.float32, jnp.bfloat16

    # ---- padded / tiled sizes ((8,128) tiling, lane-dense stores) ----
    Bp = _round_up(B, 8)
    Ep = _round_up(E, 128)
    Hp = _round_up(H, 128)

    Vp128 = _round_up(V, 128)
    tile_v = _round_up(max(1, min(tile_v, Vp128)), 128)
    # Keep >= 2 V tiles when possible so the "parallel" V axis can shard across
    # both TensorCores on v7x.
    if Vp128 >= 256 and tile_v > Vp128 // 2:
        tile_v = _round_up(Vp128 // 2, 128)
    Vp = _round_up(V, tile_v)

    tile_t = max(1, min(tile_t, T))
    Tp = _round_up(T, tile_t)

    tile_m = tile_t * Bp                      # output-GEMM M tile (divides Tp*Bp)
    while tile_m > 1024 and tile_m % 16 == 0:
        tile_m //= 2

    vmem_limit = _vmem_limit_bytes()

    def pad2(x, r, c):
        return jnp.pad(x.astype(f32), ((0, r - x.shape[0]), (0, c - x.shape[1])))

    wih_p = pad2(wih, Ep, Hp).astype(bf16)
    whh_p = pad2(whh, Hp, Hp)                 # stays f32: recurrent matmul in f32
    brnn_p = pad2(bih + bhh, 1, Hp)
    wout_p = pad2(wout, Hp, Vp).astype(bf16)
    bout_p = pad2(bout, 1, Vp)

    # ---- embedding gather (XLA glue), gathered directly in time-major order ----
    # TODO(synk): fuse the gather into kernel A (scalar-prefetched token ids +
    # per-row DMA from emb_table in pl.ANY) to remove this extra HBM pass.
    emb_table_p = jnp.pad(emb_table.astype(f32), ((0, 0), (0, Ep - E))).astype(bf16)
    tok_tm = jnp.full((Tp, Bp), pad_index, dtype=tokens.dtype)
    tok_tm = tok_tm.at[:T, :B].set(tokens.T)
    emb_flat = emb_table_p[tok_tm.reshape(-1)]           # (Tp*Bp, Ep) bf16

    # ---- kernel A: recurrence, executed exactly once ----
    try:
        hs_flat = _run_recurrence(emb_flat, wih_p, whh_p, brnn_p, Bp=Bp,
                                  tile_t=tile_t, single_buffer_weights=True,
                                  vmem_limit=vmem_limit)
    except Exception:
        # Fallback for jax versions without BlockSpec(pipeline_mode=pl.Buffered(1)).
        hs_flat = _run_recurrence(emb_flat, wih_p, whh_p, brnn_p, Bp=Bp,
                                  tile_t=tile_t, single_buffer_weights=False,
                                  vmem_limit=vmem_limit)

    # ---- kernel B: output projection (fully parallel tiled GEMM) ----
    out_flat = _run_output_proj(hs_flat, wout_p, bout_p, tile_m=tile_m,
                                tile_v=tile_v, vmem_limit=vmem_limit)

    # (Tp*Bp, Vp) bf16 -> (B, V, T) f32  (== torch .permute(0, 2, 1) of (B, T, V)).
    # TODO(synk): fuse this permute into the downstream consumer (e.g. the loss)
    # to remove one extra HBM pass over the logits.
    out_tm = out_flat.reshape(Tp, Bp, Vp)[:T, :B, :V]
    return jnp.transpose(out_tm, (1, 2, 0)).astype(f32)


# --------------------------------------------------------------------------- #
# Pure-JAX reference (mirrors PyTorch semantics) + param init + test
# --------------------------------------------------------------------------- #
def lm_rnn_reference(tokens, params):
    emb = params["emb_table"][tokens]                    # (B, T, E)
    B = emb.shape[0]
    H = params["whh"].shape[0]

    def step(h, x_t):
        h_new = jnp.tanh(x_t @ params["wih"] + h @ params["whh"]
                         + params["bih"] + params["bhh"])
        return h_new, h_new

    h0 = jnp.zeros((B, H), jnp.float32)
    _, hs = lax.scan(step, h0, jnp.transpose(emb, (1, 0, 2)))   # (T, B, H)
    rnn_out = jnp.transpose(hs, (1, 0, 2))                      # (B, T, H)
    logits = rnn_out @ params["wout"] + params["bout"]          # (B, T, V)
    return jnp.transpose(logits, (0, 2, 1))                     # (B, V, T)


def init_params(key, emb_size, hidden_size, output_size, pad_index=0):
    ks = jax.random.split(key, 7)
    scale = 0.1
    emb_table = scale * jax.random.normal(ks[0], (output_size, emb_size), jnp.float32)
    emb_table = emb_table.at[pad_index].set(0.0)         # padding_idx row is zero
    wih = scale * jax.random.normal(ks[1], (emb_size, hidden_size), jnp.float32)
    whh = scale * jax.random.normal(ks[2], (hidden_size, hidden_size), jnp.float32)
    bih = scale * jax.random.normal(ks[3], (1, hidden_size), jnp.float32)
    bhh = scale * jax.random.normal(ks[4], (1, hidden_size), jnp.float32)
    wout = scale * jax.random.normal(ks[5], (hidden_size, output_size), jnp.float32)
    bout = scale * jax.random.normal(ks[6], (1, output_size), jnp.float32)
    return dict(emb_table=emb_table, wih=wih, whh=whh, bih=bih, bhh=bhh,
                wout=wout, bout=bout)


if __name__ == "__main__":
    # Small shapes consistent with the module.
    B, T = 2, 8
    emb_size, hidden_size, vocab_size = 32, 32, 16
    pad_index = 0

    key = jax.random.PRNGKey(0)
    k_params, k_tok = jax.random.split(key)
    params = init_params(k_params, emb_size, hidden_size, vocab_size, pad_index)
    tokens = jax.random.randint(k_tok, (B, T), 0, vocab_size, dtype=jnp.int32)

    out = lm_rnn_pallas(tokens, params, pad_index=pad_index)
    out = jax.block_until_ready(out)

    ref = lm_rnn_reference(tokens, params)
    assert out.shape == (B, vocab_size, T), out.shape
    # bf16 MXU operands / bf16 hs+logits slabs with f32 accumulation.
    max_err = float(jnp.max(jnp.abs(out - ref)))
    assert jnp.allclose(out, ref, atol=2e-2, rtol=2e-2), max_err

    print("KERNEL_OK")
</pallas_src>

<mosaic_0001>
module attributes {stable_mosaic.version = 11 : i64} {
  func.func @_recurrence_kernel(%arg0: i32, %arg1: memref<64x128xbf16, #tpu.memory_space<vmem>>, %arg2: memref<128x128xbf16, #tpu.memory_space<vmem>>, %arg3: memref<128x128xf32, #tpu.memory_space<vmem>>, %arg4: memref<1x128xf32, #tpu.memory_space<vmem>>, %arg5: memref<64x128xbf16, #tpu.memory_space<vmem>>, %arg6: memref<8x128xf32, #tpu.memory_space<vmem>>, %arg7: memref<64x128xf32, #tpu.memory_space<vmem>>) attributes {dimension_semantics = [#tpu.dimension_semantics<arbitrary>], iteration_bounds = array<i64: 1>, scalar_prefetch = 0 : i64, scratch_operands = 2 : i64, tpu.core_type = #tpu.core_type<tc>, window_params = [{transform_indices = @transform_0, window_bounds = array<i64: 64, 128>}, {pipeline_mode = #tpu.pipeline_mode<synchronous>, transform_indices = @transform_1, window_bounds = array<i64: 128, 128>}, {pipeline_mode = #tpu.pipeline_mode<synchronous>, transform_indices = @transform_2, window_bounds = array<i64: 128, 128>}, {pipeline_mode = #tpu.pipeline_mode<synchronous>, transform_indices = @transform_3, window_bounds = array<i64: 1, 128>}, {transform_indices = @transform_4, window_bounds = array<i64: 64, 128>}]} {
    %c0_i32 = arith.constant 0 : i32
    %0 = arith.cmpi eq, %arg0, %c0_i32 : i32
    %1 = arith.extui %0 : i1 to i32
    %c0_i32_0 = arith.constant 0 : i32
    %2 = arith.cmpi ne, %1, %c0_i32_0 : i32
    scf.if %2 {
      %cst_51 = arith.constant 0.000000e+00 : f32
      %88 = vector.broadcast %cst_51 : f32 to vector<8x128xf32>
      %c0_52 = arith.constant 0 : index
      %c0_53 = arith.constant 0 : index
      %89 = vector.load %arg6[%c0_52, %c0_53] : memref<8x128xf32, #tpu.memory_space<vmem>>, vector<8x128xf32>
      tpu.vector_store %arg6[%c0_52, %c0_53], %88 {strides = array<i32>} : memref<8x128xf32, #tpu.memory_space<vmem>>, vector<8x128xf32>,
    } else {
    }
    %c0 = arith.constant 0 : index
    %c0_1 = arith.constant 0 : index
    %3 = vector.load %arg1[%c0, %c0_1] : memref<64x128xbf16, #tpu.memory_space<vmem>>, vector<64x128xbf16>
    %c0_2 = arith.constant 0 : index
    %c0_3 = arith.constant 0 : index
    %4 = vector.load %arg2[%c0_2, %c0_3] : memref<128x128xbf16, #tpu.memory_space<vmem>>, vector<128x128xbf16>
    %cst = arith.constant dense<0.000000e+00> : vector<64x128xf32>
    %5 = tpu.matmul %3, %4, %cst {dimension_numbers = #tpu.dot_dimension_numbers<[1], [0], [0], [1], [0, 0, 1, 1], [], []>} : vector<64x128xbf16>, vector<128x128xbf16>, vector<64x128xf32> -> vector<64x128xf32>
    %c0_4 = arith.constant 0 : index
    %c0_5 = arith.constant 0 : index
    %6 = vector.load %arg4[%c0_4, %c0_5] : memref<1x128xf32, #tpu.memory_space<vmem>>, vector<1x128xf32>
    %7 = vector.broadcast %6 : vector<1x128xf32> to vector<64x128xf32>
    %8 = arith.addf %5, %7 : vector<64x128xf32>
    %c0_6 = arith.constant 0 : index
    %c0_7 = arith.constant 0 : index
    %9 = vector.load %arg7[%c0_6, %c0_7] : memref<64x128xf32, #tpu.memory_space<vmem>>, vector<64x128xf32>
    tpu.vector_store %arg7[%c0_6, %c0_7], %8 {strides = array<i32>} : memref<64x128xf32, #tpu.memory_space<vmem>>, vector<64x128xf32>,
    %c0_8 = arith.constant 0 : index
    %c0_9 = arith.constant 0 : index
    %10 = vector.load %arg3[%c0_8, %c0_9] : memref<128x128xf32, #tpu.memory_space<vmem>>, vector<128x128xf32>
    %c0_10 = arith.constant 0 : index
    %c0_11 = arith.constant 0 : index
    %11 = vector.load %arg6[%c0_10, %c0_11] : memref<8x128xf32, #tpu.memory_space<vmem>>, vector<8x128xf32>
    %c0_i32_12 = arith.constant 0 : i32
    %c8_i32 = arith.constant 8 : i32
    %12 = arith.muli %c0_i32_12, %c8_i32 : i32
    %13 = tpu.assume_multiple %12, 8 : i32
    %14 = arith.index_cast %13 : i32 to index
    %c0_13 = arith.constant 0 : index
    %15 = vector.load %arg7[%14, %c0_13] : memref<64x128xf32, #tpu.memory_space<vmem>>, vector<8x128xf32>
    %cst_14 = arith.constant dense<0.000000e+00> : vector<8x128xf32>
    %16 = tpu.matmul %11, %10, %cst_14 {dimension_numbers = #tpu.dot_dimension_numbers<[1], [0], [0], [1], [0, 0, 1, 1], [], []>} : vector<8x128xf32>, vector<128x128xf32>, vector<8x128xf32> -> vector<8x128xf32>
    %17 = arith.addf %15, %16 : vector<8x128xf32>
    %18 = math.tanh %17 : vector<8x128xf32>
    %19 = arith.index_cast %13 : i32 to index
    %c0_15 = arith.constant 0 : index
    %20 = vector.load %arg7[%19, %c0_15] : memref<64x128xf32, #tpu.memory_space<vmem>>, vector<8x128xf32>
    tpu.vector_store %arg7[%19, %c0_15], %18 {strides = array<i32>} : memref<64x128xf32, #tpu.memory_space<vmem>>, vector<8x128xf32>,
    %c1_i32 = arith.constant 1 : i32
    %c8_i32_16 = arith.constant 8 : i32
    %21 = arith.muli %c1_i32, %c8_i32_16 : i32
    %22 = tpu.assume_multiple %21, 8 : i32
    %23 = arith.index_cast %22 : i32 to index
    %c0_17 = arith.constant 0 : index
    %24 = vector.load %arg7[%23, %c0_17] : memref<64x128xf32, #tpu.memory_space<vmem>>, vector<8x128xf32>
    %cst_18 = arith.constant dense<0.000000e+00> : vector<8x128xf32>
    %25 = tpu.matmul %18, %10, %cst_18 {dimension_numbers = #tpu.dot_dimension_numbers<[1], [0], [0], [1], [0, 0, 1, 1], [], []>} : vector<8x128xf32>, vector<128x128xf32>, vector<8x128xf32> -> vector<8x128xf32>
    %26 = arith.addf %24, %25 : vector<8x128xf32>
    %27 = math.tanh %26 : vector<8x128xf32>
    %28 = arith.index_cast %22 : i32 to index
    %c0_19 = arith.constant 0 : index
    %29 = vector.load %arg7[%28, %c0_19] : memref<64x128xf32, #tpu.memory_space<vmem>>, vector<8x128xf32>
    tpu.vector_store %arg7[%28, %c0_19], %27 {strides = array<i32>} : memref<64x128xf32, #tpu.memory_space<vmem>>, vector<8x128xf32>,
    %c2_i32 = arith.constant 2 : i32
    %c8_i32_20 = arith.constant 8 : i32
    %30 = arith.muli %c2_i32, %c8_i32_20 : i32
    %31 = tpu.assume_multiple %30, 8 : i32
    %32 = arith.index_cast %31 : i32 to index
    %c0_21 = arith.constant 0 : index
    %33 = vector.load %arg7[%32, %c0_21] : memref<64x128xf32, #tpu.memory_space<vmem>>, vector<8x128xf32>
    %cst_22 = arith.constant dense<0.000000e+00> : vector<8x128xf32>
    %34 = tpu.matmul %27, %10, %cst_22 {dimension_numbers = #tpu.dot_dimension_numbers<[1], [0], [0], [1], [0, 0, 1, 1], [], []>} : vector<8x128xf32>, vector<128x128xf32>, vector<8x128xf32> -> vector<8x128xf32>
    %35 = arith.addf %33, %34 : vector<8x128xf32>
    %36 = math.tanh %35 : vector<8x128xf32>
    %37 = arith.index_cast %31 : i32 to index
    %c0_23 = arith.constant 0 : index
    %38 = vector.load %arg7[%37, %c0_23] : memref<64x128xf32, #tpu.memory_space<vmem>>, vector<8x128xf32>
    tpu.vector_store %arg7[%37, %c0_23], %36 {strides = array<i32>} : memref<64x128xf32, #tpu.memory_space<vmem>>, vector<8x128xf32>,
    %c3_i32 = arith.constant 3 : i32
    %c8_i32_24 = arith.constant 8 : i32
    %39 = arith.muli %c3_i32, %c8_i32_24 : i32
    %40 = tpu.assume_multiple %39, 8 : i32
    %41 = arith.index_cast %40 : i32 to index
    %c0_25 = arith.constant 0 : index
    %42 = vector.load %arg7[%41, %c0_25] : memref<64x128xf32, #tpu.memory_space<vmem>>, vector<8x128xf32>
    %cst_26 = arith.constant dense<0.000000e+00> : vector<8x128xf32>
    %43 = tpu.matmul %36, %10, %cst_26 {dimension_numbers = #tpu.dot_dimension_numbers<[1], [0], [0], [1], [0, 0, 1, 1], [], []>} : vector<8x128xf32>, vector<128x128xf32>, vector<8x128xf32> -> vector<8x128xf32>
    %44 = arith.addf %42, %43 : vector<8x128xf32>
    %45 = math.tanh %44 : vector<8x128xf32>
    %46 = arith.index_cast %40 : i32 to index
    %c0_27 = arith.constant 0 : index
    %47 = vector.load %arg7[%46, %c0_27] : memref<64x128xf32, #tpu.memory_space<vmem>>, vector<8x128xf32>
    tpu.vector_store %arg7[%46, %c0_27], %45 {strides = array<i32>} : memref<64x128xf32, #tpu.memory_space<vmem>>, vector<8x128xf32>,
    %c4_i32 = arith.constant 4 : i32
    %c8_i32_28 = arith.constant 8 : i32
    %48 = arith.muli %c4_i32, %c8_i32_28 : i32
    %49 = tpu.assume_multiple %48, 8 : i32
    %50 = arith.index_cast %49 : i32 to index
    %c0_29 = arith.constant 0 : index
    %51 = vector.load %arg7[%50, %c0_29] : memref<64x128xf32, #tpu.memory_space<vmem>>, vector<8x128xf32>
    %cst_30 = arith.constant dense<0.000000e+00> : vector<8x128xf32>
    %52 = tpu.matmul %45, %10, %cst_30 {dimension_numbers = #tpu.dot_dimension_numbers<[1], [0], [0], [1], [0, 0, 1, 1], [], []>} : vector<8x128xf32>, vector<128x128xf32>, vector<8x128xf32> -> vector<8x128xf32>
    %53 = arith.addf %51, %52 : vector<8x128xf32>
    %54 = math.tanh %53 : vector<8x128xf32>
    %55 = arith.index_cast %49 : i32 to index
    %c0_31 = arith.constant 0 : index
    %56 = vector.load %arg7[%55, %c0_31] : memref<64x128xf32, #tpu.memory_space<vmem>>, vector<8x128xf32>
    tpu.vector_store %arg7[%55, %c0_31], %54 {strides = array<i32>} : memref<64x128xf32, #tpu.memory_space<vmem>>, vector<8x128xf32>,
    %c5_i32 = arith.constant 5 : i32
    %c8_i32_32 = arith.constant 8 : i32
    %57 = arith.muli %c5_i32, %c8_i32_32 : i32
    %58 = tpu.assume_multiple %57, 8 : i32
    %59 = arith.index_cast %58 : i32 to index
    %c0_33 = arith.constant 0 : index
    %60 = vector.load %arg7[%59, %c0_33] : memref<64x128xf32, #tpu.memory_space<vmem>>, vector<8x128xf32>
    %cst_34 = arith.constant dense<0.000000e+00> : vector<8x128xf32>
    %61 = tpu.matmul %54, %10, %cst_34 {dimension_numbers = #tpu.dot_dimension_numbers<[1], [0], [0], [1], [0, 0, 1, 1], [], []>} : vector<8x128xf32>, vector<128x128xf32>, vector<8x128xf32> -> vector<8x128xf32>
    %62 = arith.addf %60, %61 : vector<8x128xf32>
    %63 = math.tanh %62 : vector<8x128xf32>
    %64 = arith.index_cast %58 : i32 to index
    %c0_35 = arith.constant 0 : index
    %65 = vector.load %arg7[%64, %c0_35] : memref<64x128xf32, #tpu.memory_space<vmem>>, vector<8x128xf32>
    tpu.vector_store %arg7[%64, %c0_35], %63 {strides = array<i32>} : memref<64x128xf32, #tpu.memory_space<vmem>>, vector<8x128xf32>,
    %c6_i32 = arith.constant 6 : i32
    %c8_i32_36 = arith.constant 8 : i32
    %66 = arith.muli %c6_i32, %c8_i32_36 : i32
    %67 = tpu.assume_multiple %66, 8 : i32
    %68 = arith.index_cast %67 : i32 to index
    %c0_37 = arith.constant 0 : index
    %69 = vector.load %arg7[%68, %c0_37] : memref<64x128xf32, #tpu.memory_space<vmem>>, vector<8x128xf32>
    %cst_38 = arith.constant dense<0.000000e+00> : vector<8x128xf32>
    %70 = tpu.matmul %63, %10, %cst_38 {dimension_numbers = #tpu.dot_dimension_numbers<[1], [0], [0], [1], [0, 0, 1, 1], [], []>} : vector<8x128xf32>, vector<128x128xf32>, vector<8x128xf32> -> vector<8x128xf32>
    %71 = arith.addf %69, %70 : vector<8x128xf32>
    %72 = math.tanh %71 : vector<8x128xf32>
    %73 = arith.index_cast %67 : i32 to index
    %c0_39 = arith.constant 0 : index
    %74 = vector.load %arg7[%73, %c0_39] : memref<64x128xf32, #tpu.memory_space<vmem>>, vector<8x128xf32>
    tpu.vector_store %arg7[%73, %c0_39], %72 {strides = array<i32>} : memref<64x128xf32, #tpu.memory_space<vmem>>, vector<8x128xf32>,
    %c7_i32 = arith.constant 7 : i32
    %c8_i32_40 = arith.constant 8 : i32
    %75 = arith.muli %c7_i32, %c8_i32_40 : i32
    %76 = tpu.assume_multiple %75, 8 : i32
    %77 = arith.index_cast %76 : i32 to index
    %c0_41 = arith.constant 0 : index
    %78 = vector.load %arg7[%77, %c0_41] : memref<64x128xf32, #tpu.memory_space<vmem>>, vector<8x128xf32>
    %cst_42 = arith.constant dense<0.000000e+00> : vector<8x128xf32>
    %79 = tpu.matmul %72, %10, %cst_42 {dimension_numbers = #tpu.dot_dimension_numbers<[1], [0], [0], [1], [0, 0, 1, 1], [], []>} : vector<8x128xf32>, vector<128x128xf32>, vector<8x128xf32> -> vector<8x128xf32>
    %80 = arith.addf %78, %79 : vector<8x128xf32>
    %81 = math.tanh %80 : vector<8x128xf32>
    %82 = arith.index_cast %76 : i32 to index
    %c0_43 = arith.constant 0 : index
    %83 = vector.load %arg7[%82, %c0_43] : memref<64x128xf32, #tpu.memory_space<vmem>>, vector<8x128xf32>
    tpu.vector_store %arg7[%82, %c0_43], %81 {strides = array<i32>} : memref<64x128xf32, #tpu.memory_space<vmem>>, vector<8x128xf32>,
    %c8_i32_44 = arith.constant 8 : i32
    %c0_45 = arith.constant 0 : index
    %c0_46 = arith.constant 0 : index
    %84 = vector.load %arg6[%c0_45, %c0_46] : memref<8x128xf32, #tpu.memory_space<vmem>>, vector<8x128xf32>
    tpu.vector_store %arg6[%c0_45, %c0_46], %81 {strides = array<i32>} : memref<8x128xf32, #tpu.memory_space<vmem>>, vector<8x128xf32>,
    %c0_47 = arith.constant 0 : index
    %c0_48 = arith.constant 0 : index
    %85 = vector.load %arg7[%c0_47, %c0_48] : memref<64x128xf32, #tpu.memory_space<vmem>>, vector<64x128xf32>
    %86 = arith.truncf %85 : vector<64x128xf32> to vector<64x128xbf16>
    %c0_49 = arith.constant 0 : index
    %c0_50 = arith.constant 0 : index
    %87 = vector.load %arg5[%c0_49, %c0_50] : memref<64x128xbf16, #tpu.memory_space<vmem>>, vector<64x128xbf16>
    tpu.vector_store %arg5[%c0_49, %c0_50], %86 {strides = array<i32>} : memref<64x128xbf16, #tpu.memory_space<vmem>>, vector<64x128xbf16>,
    return
  }
  func.func @transform_0(%arg0: i32) -> (i32, i32) {
    %c0_i32 = arith.constant 0 : i32
    %c0_i32_0 = arith.constant 0 : i32
    return %arg0, %c0_i32 : i32, i32
  }
  func.func @transform_1(%arg0: i32) -> (i32, i32) {
    %c0_i32 = arith.constant 0 : i32
    %c0_i32_0 = arith.constant 0 : i32
    %c0_i32_1 = arith.constant 0 : i32
    return %c0_i32, %c0_i32_0 : i32, i32
  }
  func.func @transform_2(%arg0: i32) -> (i32, i32) {
    %c0_i32 = arith.constant 0 : i32
    %c0_i32_0 = arith.constant 0 : i32
    %c0_i32_1 = arith.constant 0 : i32
    return %c0_i32, %c0_i32_0 : i32, i32
  }
  func.func @transform_3(%arg0: i32) -> (i32, i32) {
    %c0_i32 = arith.constant 0 : i32
    %c0_i32_0 = arith.constant 0 : i32
    %c0_i32_1 = arith.constant 0 : i32
    return %c0_i32, %c0_i32_0 : i32, i32
  }
  func.func @transform_4(%arg0: i32) -> (i32, i32) {
    %c0_i32 = arith.constant 0 : i32
    %c0_i32_0 = arith.constant 0 : i32
    return %arg0, %c0_i32 : i32, i32
  }
}

module attributes {stable_mosaic.version = 11 : i64} {
  func.func @_recurrence_kernel(%arg0: i32, %arg1: memref<64x128xbf16, #tpu.memory_space<vmem>>, %arg2: memref<128x128xbf16, #tpu.memory_space<vmem>>, %arg3: memref<128x128xf32, #tpu.memory_space<vmem>>, %arg4: memref<1x128xf32, #tpu.memory_space<vmem>>, %arg5: memref<64x128xbf16, #tpu.memory_space<vmem>>, %arg6: memref<8x128xf32, #tpu.memory_space<vmem>>, %arg7: memref<64x128xf32, #tpu.memory_space<vmem>>) attributes {dimension_semantics = [#tpu.dimension_semantics<arbitrary>], iteration_bounds = array<i64: 1>, scalar_prefetch = 0 : i64, scratch_operands = 2 : i64, tpu.core_type = #tpu.core_type<tc>, window_params = [{transform_indices = @transform_0, window_bounds = array<i64: 64, 128>}, {pipeline_mode = #tpu.pipeline_mode<synchronous>, transform_indices = @transform_1, window_bounds = array<i64: 128, 128>}, {pipeline_mode = #tpu.pipeline_mode<synchronous>, transform_indices = @transform_2, window_bounds = array<i64: 128, 128>}, {pipeline_mode = #tpu.pipeline_mode<synchronous>, transform_indices = @transform_3, window_bounds = array<i64: 1, 128>}, {transform_indices = @transform_4, window_bounds = array<i64: 64, 128>}]} {
    %c0_i32 = arith.constant 0 : i32
    %0 = arith.cmpi eq, %arg0, %c0_i32 : i32
    %1 = arith.extui %0 : i1 to i32
    %c0_i32_0 = arith.constant 0 : i32
    %2 = arith.cmpi ne, %1, %c0_i32_0 : i32
    scf.if %2 {
      %cst_51 = arith.constant 0.000000e+00 : f32
      %88 = vector.broadcast %cst_51 : f32 to vector<8x128xf32>
      %c0_52 = arith.constant 0 : index
      %c0_53 = arith.constant 0 : index
      %89 = vector.load %arg6[%c0_52, %c0_53] : memref<8x128xf32, #tpu.memory_space<vmem>>, vector<8x128xf32>
      tpu.vector_store %arg6[%c0_52, %c0_53], %88 {strides = array<i32>} : memref<8x128xf32, #tpu.memory_space<vmem>>, vector<8x128xf32>,
    } else {
    }
    %c0 = arith.constant 0 : index
    %c0_1 = arith.constant 0 : index
    %3 = vector.load %arg1[%c0, %c0_1] : memref<64x128xbf16, #tpu.memory_space<vmem>>, vector<64x128xbf16>
    %c0_2 = arith.constant 0 : index
    %c0_3 = arith.constant 0 : index
    %4 = vector.load %arg2[%c0_2, %c0_3] : memref<128x128xbf16, #tpu.memory_space<vmem>>, vector<128x128xbf16>
    %cst = arith.constant dense<0.000000e+00> : vector<64x128xf32>
    %5 = tpu.matmul %3, %4, %cst {dimension_numbers = #tpu.dot_dimension_numbers<[1], [0], [0], [1], [0, 0, 1, 1], [], []>} : vector<64x128xbf16>, vector<128x128xbf16>, vector<64x128xf32> -> vector<64x128xf32>
    %c0_4 = arith.constant 0 : index
    %c0_5 = arith.constant 0 : index
    %6 = vector.load %arg4[%c0_4, %c0_5] : memref<1x128xf32, #tpu.memory_space<vmem>>, vector<1x128xf32>
    %7 = vector.broadcast %6 : vector<1x128xf32> to vector<64x128xf32>
    %8 = arith.addf %5, %7 : vector<64x128xf32>
    %c0_6 = arith.constant 0 : index
    %c0_7 = arith.constant 0 : index
    %9 = vector.load %arg7[%c0_6, %c0_7] : memref<64x128xf32, #tpu.memory_space<vmem>>, vector<64x128xf32>
    tpu.vector_store %arg7[%c0_6, %c0_7], %8 {strides = array<i32>} : memref<64x128xf32, #tpu.memory_space<vmem>>, vector<64x128xf32>,
    %c0_8 = arith.constant 0 : index
    %c0_9 = arith.constant 0 : index
    %10 = vector.load %arg3[%c0_8, %c0_9] : memref<128x128xf32, #tpu.memory_space<vmem>>, vector<128x128xf32>
    %c0_10 = arith.constant 0 : index
    %c0_11 = arith.constant 0 : index
    %11 = vector.load %arg6[%c0_10, %c0_11] : memref<8x128xf32, #tpu.memory_space<vmem>>, vector<8x128xf32>
    %c0_i32_12 = arith.constant 0 : i32
    %c8_i32 = arith.constant 8 : i32
    %12 = arith.muli %c0_i32_12, %c8_i32 : i32
    %13 = tpu.assume_multiple %12, 8 : i32
    %14 = arith.index_cast %13 : i32 to index
    %c0_13 = arith.constant 0 : index
    %15 = vector.load %arg7[%14, %c0_13] : memref<64x128xf32, #tpu.memory_space<vmem>>, vector<8x128xf32>
    %cst_14 = arith.constant dense<0.000000e+00> : vector<8x128xf32>
    %16 = tpu.matmul %11, %10, %cst_14 {dimension_numbers = #tpu.dot_dimension_numbers<[1], [0], [0], [1], [0, 0, 1, 1], [], []>} : vector<8x128xf32>, vector<128x128xf32>, vector<8x128xf32> -> vector<8x128xf32>
    %17 = arith.addf %15, %16 : vector<8x128xf32>
    %18 = math.tanh %17 : vector<8x128xf32>
    %19 = arith.index_cast %13 : i32 to index
    %c0_15 = arith.constant 0 : index
    %20 = vector.load %arg7[%19, %c0_15] : memref<64x128xf32, #tpu.memory_space<vmem>>, vector<8x128xf32>
    tpu.vector_store %arg7[%19, %c0_15], %18 {strides = array<i32>} : memref<64x128xf32, #tpu.memory_space<vmem>>, vector<8x128xf32>,
    %c1_i32 = arith.constant 1 : i32
    %c8_i32_16 = arith.constant 8 : i32
    %21 = arith.muli %c1_i32, %c8_i32_16 : i32
    %22 = tpu.assume_multiple %21, 8 : i32
    %23 = arith.index_cast %22 : i32 to index
    %c0_17 = arith.constant 0 : index
    %24 = vector.load %arg7[%23, %c0_17] : memref<64x128xf32, #tpu.memory_space<vmem>>, vector<8x128xf32>
    %cst_18 = arith.constant dense<0.000000e+00> : vector<8x128xf32>
    %25 = tpu.matmul %18, %10, %cst_18 {dimension_numbers = #tpu.dot_dimension_numbers<[1], [0], [0], [1], [0, 0, 1, 1], [], []>} : vector<8x128xf32>, vector<128x128xf32>, vector<8x128xf32> -> vector<8x128xf32>
    %26 = arith.addf %24, %25 : vector<8x128xf32>
    %27 = math.tanh %26 : vector<8x128xf32>
    %28 = arith.index_cast %22 : i32 to index
    %c0_19 = arith.constant 0 : index
    %29 = vector.load %arg7[%28, %c0_19] : memref<64x128xf32, #tpu.memory_space<vmem>>, vector<8x128xf32>
    tpu.vector_store %arg7[%28, %c0_19], %27 {strides = array<i32>} : memref<64x128xf32, #tpu.memory_space<vmem>>, vector<8x128xf32>,
    %c2_i32 = arith.constant 2 : i32
    %c8_i32_20 = arith.constant 8 : i32
    %30 = arith.muli %c2_i32, %c8_i32_20 : i32
    %31 = tpu.assume_multiple %30, 8 : i32
    %32 = arith.index_cast %31 : i32 to index
    %c0_21 = arith.constant 0 : index
    %33 = vector.load %arg7[%32, %c0_21] : memref<64x128xf32, #tpu.memory_space<vmem>>, vector<8x128xf32>
    %cst_22 = arith.constant dense<0.000000e+00> : vector<8x128xf32>
    %34 = tpu.matmul %27, %10, %cst_22 {dimension_numbers = #tpu.dot_dimension_numbers<[1], [0], [0], [1], [0, 0, 1, 1], [], []>} : vector<8x128xf32>, vector<128x128xf32>, vector<8x128xf32> -> vector<8x128xf32>
    %35 = arith.addf %33, %34 : vector<8x128xf32>
    %36 = math.tanh %35 : vector<8x128xf32>
    %37 = arith.index_cast %31 : i32 to index
    %c0_23 = arith.constant 0 : index
    %38 = vector.load %arg7[%37, %c0_23] : memref<64x128xf32, #tpu.memory_space<vmem>>, vector<8x128xf32>
    tpu.vector_store %arg7[%37, %c0_23], %36 {strides = array<i32>} : memref<64x128xf32, #tpu.memory_space<vmem>>, vector<8x128xf32>,
    %c3_i32 = arith.constant 3 : i32
    %c8_i32_24 = arith.constant 8 : i32
    %39 = arith.muli %c3_i32, %c8_i32_24 : i32
    %40 = tpu.assume_multiple %39, 8 : i32
    %41 = arith.index_cast %40 : i32 to index
    %c0_25 = arith.constant 0 : index
    %42 = vector.load %arg7[%41, %c0_25] : memref<64x128xf32, #tpu.memory_space<vmem>>, vector<8x128xf32>
    %cst_26 = arith.constant dense<0.000000e+00> : vector<8x128xf32>
    %43 = tpu.matmul %36, %10, %cst_26 {dimension_numbers = #tpu.dot_dimension_numbers<[1], [0], [0], [1], [0, 0, 1, 1], [], []>} : vector<8x128xf32>, vector<128x128xf32>, vector<8x128xf32> -> vector<8x128xf32>
    %44 = arith.addf %42, %43 : vector<8x128xf32>
    %45 = math.tanh %44 : vector<8x128xf32>
    %46 = arith.index_cast %40 : i32 to index
    %c0_27 = arith.constant 0 : index
    %47 = vector.load %arg7[%46, %c0_27] : memref<64x128xf32, #tpu.memory_space<vmem>>, vector<8x128xf32>
    tpu.vector_store %arg7[%46, %c0_27], %45 {strides = array<i32>} : memref<64x128xf32, #tpu.memory_space<vmem>>, vector<8x128xf32>,
    %c4_i32 = arith.constant 4 : i32
    %c8_i32_28 = arith.constant 8 : i32
    %48 = arith.muli %c4_i32, %c8_i32_28 : i32
    %49 = tpu.assume_multiple %48, 8 : i32
    %50 = arith.index_cast %49 : i32 to index
    %c0_29 = arith.constant 0 : index
    %51 = vector.load %arg7[%50, %c0_29] : memref<64x128xf32, #tpu.memory_space<vmem>>, vector<8x128xf32>
    %cst_30 = arith.constant dense<0.000000e+00> : vector<8x128xf32>
    %52 = tpu.matmul %45, %10, %cst_30 {dimension_numbers = #tpu.dot_dimension_numbers<[1], [0], [0], [1], [0, 0, 1, 1], [], []>} : vector<8x128xf32>, vector<128x128xf32>, vector<8x128xf32> -> vector<8x128xf32>
    %53 = arith.addf %51, %52 : vector<8x128xf32>
    %54 = math.tanh %53 : vector<8x128xf32>
    %55 = arith.index_cast %49 : i32 to index
    %c0_31 = arith.constant 0 : index
    %56 = vector.load %arg7[%55, %c0_31] : memref<64x128xf32, #tpu.memory_space<vmem>>, vector<8x128xf32>
    tpu.vector_store %arg7[%55, %c0_31], %54 {strides = array<i32>} : memref<64x128xf32, #tpu.memory_space<vmem>>, vector<8x128xf32>,
    %c5_i32 = arith.constant 5 : i32
    %c8_i32_32 = arith.constant 8 : i32
    %57 = arith.muli %c5_i32, %c8_i32_32 : i32
    %58 = tpu.assume_multiple %57, 8 : i32
    %59 = arith.index_cast %58 : i32 to index
    %c0_33 = arith.constant 0 : index
    %60 = vector.load %arg7[%59, %c0_33] : memref<64x128xf32, #tpu.memory_space<vmem>>, vector<8x128xf32>
    %cst_34 = arith.constant dense<0.000000e+00> : vector<8x128xf32>
    %61 = tpu.matmul %54, %10, %cst_34 {dimension_numbers = #tpu.dot_dimension_numbers<[1], [0], [0], [1], [0, 0, 1, 1], [], []>} : vector<8x128xf32>, vector<128x128xf32>, vector<8x128xf32> -> vector<8x128xf32>
    %62 = arith.addf %60, %61 : vector<8x128xf32>
    %63 = math.tanh %62 : vector<8x128xf32>
    %64 = arith.index_cast %58 : i32 to index
    %c0_35 = arith.constant 0 : index
    %65 = vector.load %arg7[%64, %c0_35] : memref<64x128xf32, #tpu.memory_space<vmem>>, vector<8x128xf32>
    tpu.vector_store %arg7[%64, %c0_35], %63 {strides = array<i32>} : memref<64x128xf32, #tpu.memory_space<vmem>>, vector<8x128xf32>,
    %c6_i32 = arith.constant 6 : i32
    %c8_i32_36 = arith.constant 8 : i32
    %66 = arith.muli %c6_i32, %c8_i32_36 : i32
    %67 = tpu.assume_multiple %66, 8 : i32
    %68 = arith.index_cast %67 : i32 to index
    %c0_37 = arith.constant 0 : index
    %69 = vector.load %arg7[%68, %c0_37] : memref<64x128xf32, #tpu.memory_space<vmem>>, vector<8x128xf32>
    %cst_38 = arith.constant dense<0.000000e+00> : vector<8x128xf32>
    %70 = tpu.matmul %63, %10, %cst_38 {dimension_numbers = #tpu.dot_dimension_numbers<[1], [0], [0], [1], [0, 0, 1, 1], [], []>} : vector<8x128xf32>, vector<128x128xf32>, vector<8x128xf32> -> vector<8x128xf32>
    %71 = arith.addf %69, %70 : vector<8x128xf32>
    %72 = math.tanh %71 : vector<8x128xf32>
    %73 = arith.index_cast %67 : i32 to index
    %c0_39 = arith.constant 0 : index
    %74 = vector.load %arg7[%73, %c0_39] : memref<64x128xf32, #tpu.memory_space<vmem>>, vector<8x128xf32>
    tpu.vector_store %arg7[%73, %c0_39], %72 {strides = array<i32>} : memref<64x128xf32, #tpu.memory_space<vmem>>, vector<8x128xf32>,
    %c7_i32 = arith.constant 7 : i32
    %c8_i32_40 = arith.constant 8 : i32
    %75 = arith.muli %c7_i32, %c8_i32_40 : i32
    %76 = tpu.assume_multiple %75, 8 : i32
    %77 = arith.index_cast %76 : i32 to index
    %c0_41 = arith.constant 0 : index
    %78 = vector.load %arg7[%77, %c0_41] : memref<64x128xf32, #tpu.memory_space<vmem>>, vector<8x128xf32>
    %cst_42 = arith.constant dense<0.000000e+00> : vector<8x128xf32>
    %79 = tpu.matmul %72, %10, %cst_42 {dimension_numbers = #tpu.dot_dimension_numbers<[1], [0], [0], [1], [0, 0, 1, 1], [], []>} : vector<8x128xf32>, vector<128x128xf32>, vector<8x128xf32> -> vector<8x128xf32>
    %80 = arith.addf %78, %79 : vector<8x128xf32>
    %81 = math.tanh %80 : vector<8x128xf32>
    %82 = arith.index_cast %76 : i32 to index
    %c0_43 = arith.constant 0 : index
    %83 = vector.load %arg7[%82, %c0_43] : memref<64x128xf32, #tpu.memory_space<vmem>>, vector<8x128xf32>
    tpu.vector_store %arg7[%82, %c0_43], %81 {strides = array<i32>} : memref<64x128xf32, #tpu.memory_space<vmem>>, vector<8x128xf32>,
    %c8_i32_44 = arith.constant 8 : i32
    %c0_45 = arith.constant 0 : index
    %c0_46 = arith.constant 0 : index
    %84 = vector.load %arg6[%c0_45, %c0_46] : memref<8x128xf32, #tpu.memory_space<vmem>>, vector<8x128xf32>
    tpu.vector_store %arg6[%c0_45, %c0_46], %81 {strides = array<i32>} : memref<8x128xf32, #tpu.memory_space<vmem>>, vector<8x128xf32>,
    %c0_47 = arith.constant 0 : index
    %c0_48 = arith.constant 0 : index
    %85 = vector.load %arg7[%c0_47, %c0_48] : memref<64x128xf32, #tpu.memory_space<vmem>>, vector<64x128xf32>
    %86 = arith.truncf %85 : vector<64x128xf32> to vector<64x128xbf16>
    %c0_49 = arith.constant 0 : index
    %c0_50 = arith.constant 0 : index
    %87 = vector.load %arg5[%c0_49, %c0_50] : memref<64x128xbf16, #tpu.memory_space<vmem>>, vector<64x128xbf16>
    tpu.vector_store %arg5[%c0_49, %c0_50], %86 {strides = array<i32>} : memref<64x128xbf16, #tpu.memory_space<vmem>>, vector<64x128xbf16>,
    return
  }
  func.func @transform_0(%arg0: i32) -> (i32, i32) {
    %c0_i32 = arith.constant 0 : i32
    %c0_i32_0 = arith.constant 0 : i32
    return %arg0, %c0_i32 : i32, i32
  }
  func.func @transform_1(%arg0: i32) -> (i32, i32) {
    %c0_i32 = arith.constant 0 : i32
    %c0_i32_0 = arith.constant 0 : i32
    %c0_i32_1 = arith.constant 0 : i32
    return %c0_i32, %c0_i32_0 : i32, i32
  }
  func.func @transform_2(%arg0: i32) -> (i32, i32) {
    %c0_i32 = arith.constant 0 : i32
    %c0_i32_0 = arith.constant 0 : i32
    %c0_i32_1 = arith.constant 0 : i32
    return %c0_i32, %c0_i32_0 : i32, i32
  }
  func.func @transform_3(%arg0: i32) -> (i32, i32) {
    %c0_i32 = arith.constant 0 : i32
    %c0_i32_0 = arith.constant 0 : i32
    %c0_i32_1 = arith.constant 0 : i32
    return %c0_i32, %c0_i32_0 : i32, i32
  }
  func.func @transform_4(%arg0: i32) -> (i32, i32) {
    %c0_i32 = arith.constant 0 : i32
    %c0_i32_0 = arith.constant 0 : i32
    return %arg0, %c0_i32 : i32, i32
  }
}

</mosaic_0001>

<llo_original>
// kernel: tpu_custom_call.1
$region0: #{tpu_custom_call.1}
  #allocation0 [shape = 'u32[]', space=smem, size = 0x4, offset = 0x4, fixed_abs, tag = 'smem constant byte address 0x4 - core index']
  #allocation1 [shape = 'u32[72,128]{1,0:T(1,128)}', space=vmem, size = 0x9000, scoped, tag = 'internal scratch']
  #allocation2 [shape = 'f32[8,128]{1,0:T(8,128)}', space=vmem, size = 0x1000, scoped, tag = 'scratch operand']
  #allocation3 [shape = 'f32[64,128]{1,0:T(8,128)}', space=vmem, size = 0x8000, scoped, tag = 'scratch operand']
  %s0 = inlined_call_operand.hbm [shape: bf16[64,128], index: 0, kind: input, shape index: {}]
  %s1 = inlined_call_operand.hbm [shape: bf16[128,128], index: 1, kind: input, shape index: {}]
  %s2 = inlined_call_operand.hbm [shape: f32[128,128], index: 2, kind: input, shape index: {}]
  %s3 = inlined_call_operand.vmem [shape: f32[1,128], index: 3, kind: input, shape index: {}]
  %s4 = inlined_call_operand.hbm [shape: bf16[64,128], index: 4, kind: output, shape index: {}]
  %s5 = sld [smem:[#allocation0]]
  $region42: #{tpu_custom_call.1} parent=0
    _
  %s7 = ssub.s32 1, %s5
  %s8 = scalar_select 0, %s7, %s5
  $region1: #{tpu_custom_call.1} parent=0
    #allocation4 [shape = 'u8[16384]{0}', space=vmem, size = 0x4000, scoped, tag = 'input window, operand 0, single buffered']
    #allocation5 [shape = 's32[1]{0}', space=sflag, size = 0x4, scoped, tag = 'scoped memory for tpu_custom_call.1']
    #allocation6 [shape = 's32[1]{0}', space=sflag, size = 0x4, scoped, tag = 'scoped memory for tpu_custom_call.1']
    #allocation7 [shape = 'u8[32768]{0}', space=vmem, size = 0x8000, scoped, tag = 'input window, operand 1, single buffered']
    #allocation8 [shape = 's32[1]{0}', space=sflag, size = 0x4, scoped, tag = 'scoped memory for tpu_custom_call.1']
    #allocation9 [shape = 'u8[65536]{0}', space=vmem, size = 0x10000, scoped, tag = 'input window, operand 2, single buffered']
    #allocation10 [shape = 'u8[16384]{0}', space=vmem, size = 0x4000, scoped, tag = 'output window, operand 0, single buffered']
    %9 = vsyncpa [#allocation5], 0
    %10 = vsyncpa [#allocation8], 0
    %11 = vsyncpa [#allocation6], 0
    // Predicated region
    $region2: #{tpu_custom_call.1} parent=1 // pred_check
      _
    $region3: #{tpu_custom_call.1} parent=1 // pred_check_branch
      %13 = sbr.rel (0) target = $region5
    $region4: #{tpu_custom_call.1} parent=1 // pred_region
      %15 = vsyncadd [#allocation5], 0
      %s16 = sshll.u32 %s0, 4
      %s17 = int_to_ptr.hbm [resolvable:$true] %s16
      %s18 = sshll.u32 [#allocation4], 4
      %s19 = int_to_ptr.vmem [resolvable:$true] %s18
      %24 = dma.hbm_to_vmem [thread:$0]  %s17, 512, %s19, [#allocation5], 64, 64, 4
    $region5: #{tpu_custom_call.1} parent=1 // pred_fallthru
      _
    // Predicated region
    $region6: #{tpu_custom_call.1} parent=1 // pred_check
      _
    $region7: #{tpu_custom_call.1} parent=1 // pred_check_branch
      %26 = sbr.rel (0) target = $region9
    $region8: #{tpu_custom_call.1} parent=1 // pred_region
      %28 = vsyncadd [#allocation8], 0
      %s29 = sshll.u32 %s1, 4
      %s30 = int_to_ptr.hbm [resolvable:$true] %s29
      %s31 = sshll.u32 [#allocation7], 4
      %s32 = int_to_ptr.vmem [resolvable:$true] %s31
      %37 = dma.hbm_to_vmem [thread:$0]  %s30, 1024, %s32, [#allocation8], 64, 64, 4
    $region9: #{tpu_custom_call.1} parent=1 // pred_fallthru
      _
    // Predicated region
    $region10: #{tpu_custom_call.1} parent=1 // pred_check
      _
    $region11: #{tpu_custom_call.1} parent=1 // pred_check_branch
      %39 = sbr.rel (0) target = $region13
    $region12: #{tpu_custom_call.1} parent=1 // pred_region
      %41 = vsyncadd [#allocation8], 0
      %s42 = sshll.u32 %s2, 4
      %s43 = int_to_ptr.hbm [resolvable:$true] %s42
      %s44 = sshll.u32 [#allocation9], 4
      %s45 = int_to_ptr.vmem [resolvable:$true] %s44
      %50 = dma.hbm_to_vmem [thread:$0]  %s43, 2048, %s45, [#allocation8], 128, 128, 8
    $region13: #{tpu_custom_call.1} parent=1 // pred_fallthru
      _
    // Predicated region
    $region14: #{tpu_custom_call.1} parent=1 // pred_check
      _
    $region15: #{tpu_custom_call.1} parent=1 // pred_check_branch
      %52 = sbr.rel (0) target = $region17
    $region16: #{tpu_custom_call.1} parent=1 // pred_region
      _
    $region17: #{tpu_custom_call.1} parent=1 // pred_fallthru
      _
    // Predicated region
    $region18: #{tpu_custom_call.1} parent=1 // pred_check
      _
    $region19: #{tpu_custom_call.1} parent=1 // pred_check_branch
      %54 = sbr.rel (0) target = $region21
    $region20: #{tpu_custom_call.1} parent=1 // pred_region
      %56 = dma.done [#allocation5], 512
    $region21: #{tpu_custom_call.1} parent=1 // pred_fallthru
      _
    // Predicated region
    $region22: #{tpu_custom_call.1} parent=1 // pred_check
      _
    $region23: #{tpu_custom_call.1} parent=1 // pred_check_branch
      %58 = sbr.rel (0) target = $region25
    $region24: #{tpu_custom_call.1} parent=1 // pred_region
      %60 = dma.done [#allocation8], 1024
    $region25: #{tpu_custom_call.1} parent=1 // pred_fallthru
      _
    // Predicated region
    $region26: #{tpu_custom_call.1} parent=1 // pred_check
      _
    $region27: #{tpu_custom_call.1} parent=1 // pred_check_branch
      %62 = sbr.rel (0) target = $region29
    $region28: #{tpu_custom_call.1} parent=1 // pred_region
      %64 = dma.done [#allocation8], 2048
    $region29: #{tpu_custom_call.1} parent=1 // pred_fallthru
      _
    %p65 = scmp.eq.s32.totalorder 0, 0
    // Predicated region
    $region30: #{tpu_custom_call.1} parent=1 // pred_check
      %p66 = pneg %p65
    $region31: #{tpu_custom_call.1} parent=1 // pred_check_branch
      %68 = sbr.rel (%p66) target = $region33
    $region32: #{tpu_custom_call.1} parent=1 // pred_region
      %69 = vst [vmem:[#allocation2] sm:$0xff] 0.0
    $region33: #{tpu_custom_call.1} parent=1 // pred_fallthru
      _
    %v70 = vld [vmem:[#allocation4] sm:$0xf]
    %v71 = vld [vmem:[#allocation4 + $0x4] sm:$0xf]
    %v72 = vld [vmem:[#allocation4 + $0x8] sm:$0xf]
    %v73 = vld [vmem:[#allocation4 + $0xc] sm:$0xf]
    %v74 = vld [vmem:[#allocation4 + $0x10] sm:$0xf]
    %v75 = vld [vmem:[#allocation4 + $0x14] sm:$0xf]
    %v76 = vld [vmem:[#allocation4 + $0x18] sm:$0xf]
    %v77 = vld [vmem:[#allocation4 + $0x1c] sm:$0xf]
    %v78 = vld [vmem:[#allocation7] sm:$0xf]
    %v79 = vld [vmem:[#allocation7 + $0x4] sm:$0xf]
    %v80 = vld [vmem:[#allocation7 + $0x8] sm:$0xf]
    %v81 = vld [vmem:[#allocation7 + $0xc] sm:$0xf]
    %v82 = vld [vmem:[#allocation7 + $0x10] sm:$0xf]
    %v83 = vld [vmem:[#allocation7 + $0x14] sm:$0xf]
    %v84 = vld [vmem:[#allocation7 + $0x18] sm:$0xf]
    %v85 = vld [vmem:[#allocation7 + $0x1c] sm:$0xf]
    %v86 = vld [vmem:[#allocation7 + $0x20] sm:$0xf]
    %v87 = vld [vmem:[#allocation7 + $0x24] sm:$0xf]
    %v88 = vld [vmem:[#allocation7 + $0x28] sm:$0xf]
    %v89 = vld [vmem:[#allocation7 + $0x2c] sm:$0xf]
    %v90 = vld [vmem:[#allocation7 + $0x30] sm:$0xf]
    %v91 = vld [vmem:[#allocation7 + $0x34] sm:$0xf]
    %v92 = vld [vmem:[#allocation7 + $0x38] sm:$0xf]
    %v93 = vld [vmem:[#allocation7 + $0x3c] sm:$0xf]
    %v94 = vld [vmem:[%s3] sm:$0x1]
    %v96 = vperm.slane %v94, 0
    %v106 = vunpack.c.l.b16 %v70
    %v107 = vunpack.c.l.b16 %v71
    %v108 = vunpack.c.l.b16 %v72
    %v109 = vunpack.c.l.b16 %v73
    %v110 = vunpack.c.l.b16 %v74
    %v111 = vunpack.c.l.b16 %v75
    %v112 = vunpack.c.l.b16 %v76
    %v113 = vunpack.c.l.b16 %v77
    %v114 = vpack.c.b16 %v107, %v106
    %v115 = vpack.c.b16 %v109, %v108
    %v116 = vpack.c.b16 %v111, %v110
    %v117 = vpack.c.b16 %v113, %v112
    %v138 = vunpack.c.l.b16 %v78
    %v139 = vunpack.c.l.b16 %v79
    %v140 = vunpack.c.l.b16 %v80
    %v141 = vunpack.c.l.b16 %v81
    %v142 = vunpack.c.l.b16 %v82
    %v143 = vunpack.c.l.b16 %v83
    %v144 = vunpack.c.l.b16 %v84
    %v145 = vunpack.c.l.b16 %v85
    %v146 = vunpack.c.l.b16 %v86
    %v147 = vunpack.c.l.b16 %v87
    %v148 = vunpack.c.l.b16 %v88
    %v149 = vunpack.c.l.b16 %v89
    %v150 = vunpack.c.l.b16 %v90
    %v151 = vunpack.c.l.b16 %v91
    %v152 = vunpack.c.l.b16 %v92
    %v153 = vunpack.c.l.b16 %v93
    %v154 = vpack.c.b16 %v139, %v138
    %v155 = vpack.c.b16 %v141, %v140
    %v156 = vpack.c.b16 %v143, %v142
    %v157 = vpack.c.b16 %v145, %v144
    %v158 = vpack.c.b16 %v147, %v146
    %v159 = vpack.c.b16 %v149, %v148
    %v160 = vpack.c.b16 %v151, %v150
    %v161 = vpack.c.b16 %v153, %v152
    %170 = vmatpush.bf16.msra.mxu0 %v161
    %171 = vmatpush.bf16.msra.mxu0 %v160
    %172 = vmatpush.bf16.msra.mxu0 %v159
    %173 = vmatpush.bf16.msra.mxu0 %v158
    %174 = vmatpush.bf16.msra.mxu0 %v157
    %175 = vmatpush.bf16.msra.mxu0 %v156
    %176 = vmatpush.bf16.msra.mxu0 %v155
    %177 = vmatpush.bf16.msra.mxu0 %v154
    %178 = vmatmul.bf16.gmra.mxu0 %v114
    %v179 = vpop.f32.mrf.mxu0
    %v180 = vadd.f32 %v96, %v179
    %v181 = vpop.f32.mrf.mxu0
    %v182 = vadd.f32 %v96, %v181
    %183 = vmatmul.bf16.gmra.mxu0 %v115
    %v184 = vpop.f32.mrf.mxu0
    %v185 = vadd.f32 %v96, %v184
    %v186 = vpop.f32.mrf.mxu0
    %v187 = vadd.f32 %v96, %v186
    %188 = vmatmul.bf16.gmra.mxu0 %v116
    %v189 = vpop.f32.mrf.mxu0
    %v190 = vadd.f32 %v96, %v189
    %v191 = vpop.f32.mrf.mxu0
    %v192 = vadd.f32 %v96, %v191
    %193 = vmatmul.bf16.gmra.mxu0 %v117
    %v194 = vpop.f32.mrf.mxu0
    %v195 = vadd.f32 %v96, %v194
    %v196 = vpop.f32.mrf.mxu0
    %v197 = vadd.f32 %v96, %v196
    %198 = vdwg.mxu0
    %199 = vst [vmem:[#allocation3] sm:$0xff] %v180
    %200 = vst [vmem:[#allocation3 + $0x8] sm:$0xff] %v182
    %201 = vst [vmem:[#allocation3 + $0x10] sm:$0xff] %v185
    %202 = vst [vmem:[#allocation3 + $0x18] sm:$0xff] %v187
    %203 = vst [vmem:[#allocation3 + $0x20] sm:$0xff] %v190
    %204 = vst [vmem:[#allocation3 + $0x28] sm:$0xff] %v192
    %205 = vst [vmem:[#allocation3 + $0x30] sm:$0xff] %v195
    %206 = vst [vmem:[#allocation3 + $0x38] sm:$0xff] %v197
    %v207 = vld [vmem:[#allocation9] sm:$0xff]
    %v208 = vld [vmem:[#allocation9 + $0x8] sm:$0xff]
    %v209 = vld [vmem:[#allocation9 + $0x10] sm:$0xff]
    %v210 = vld [vmem:[#allocation9 + $0x18] sm:$0xff]
    %v211 = vld [vmem:[#allocation9 + $0x20] sm:$0xff]
    %v212 = vld [vmem:[#allocation9 + $0x28] sm:$0xff]
    %v213 = vld [vmem:[#allocation9 + $0x30] sm:$0xff]
    %v214 = vld [vmem:[#allocation9 + $0x38] sm:$0xff]
    %v215 = vld [vmem:[#allocation9 + $0x40] sm:$0xff]
    %v216 = vld [vmem:[#allocation9 + $0x48] sm:$0xff]
    %v217 = vld [vmem:[#allocation9 + $0x50] sm:$0xff]
    %v218 = vld [vmem:[#allocation9 + $0x58] sm:$0xff]
    %v219 = vld [vmem:[#allocation9 + $0x60] sm:$0xff]
    %v220 = vld [vmem:[#allocation9 + $0x68] sm:$0xff]
    %v221 = vld [vmem:[#allocation9 + $0x70] sm:$0xff]
    %v222 = vld [vmem:[#allocation9 + $0x78] sm:$0xff]
    %v223 = vld [vmem:[#allocation2] sm:$0xff]
    %v224 = vld [vmem:[#allocation3] sm:$0xff]
    %225 = vmatpush.msra.mxu0 %v222
    %226 = vmatpush.msra.mxu0 %v221
    %227 = vmatpush.msra.mxu0 %v220
    %228 = vmatpush.msra.mxu0 %v219
    %229 = vmatpush.msra.mxu0 %v218
    %230 = vmatpush.msra.mxu0 %v217
    %231 = vmatpush.msra.mxu0 %v216
    %232 = vmatpush.msra.mxu0 %v215
    %233 = vmatpush.msra.mxu0 %v214
    %234 = vmatpush.msra.mxu0 %v213
    %235 = vmatpush.msra.mxu0 %v212
    %236 = vmatpush.msra.mxu0 %v211
    %237 = vmatpush.msra.mxu0 %v210
    %238 = vmatpush.msra.mxu0 %v209
    %239 = vmatpush.msra.mxu0 %v208
    %240 = vmatpush.msra.mxu0 %v207
    %241 = vmatmul.f32.gmra.mxu0 %v223
    %v242 = vpop.f32.mrf.mxu0
    %v243 = vadd.f32 0.0, %v242
    %244 = vdwg.mxu0
    %v245 = vadd.f32 %v224, %v243
    %v246 = vtanh.pop %v245
    %247 = vst [vmem:[#allocation3] sm:$0xff] %v246
    %s248 = scalar_lea.vmem [#allocation3], 8
    %v249 = vld [vmem:[%s248] sm:$0xff]
    %250 = vmatpush.msra.mxu0 %v222
    %251 = vmatpush.msra.mxu0 %v221
    %252 = vmatpush.msra.mxu0 %v220
    %253 = vmatpush.msra.mxu0 %v219
    %254 = vmatpush.msra.mxu0 %v218
    %255 = vmatpush.msra.mxu0 %v217
    %256 = vmatpush.msra.mxu0 %v216
    %257 = vmatpush.msra.mxu0 %v215
    %258 = vmatpush.msra.mxu0 %v214
    %259 = vmatpush.msra.mxu0 %v213
    %260 = vmatpush.msra.mxu0 %v212
    %261 = vmatpush.msra.mxu0 %v211
    %262 = vmatpush.msra.mxu0 %v210
    %263 = vmatpush.msra.mxu0 %v209
    %264 = vmatpush.msra.mxu0 %v208
    %265 = vmatpush.msra.mxu0 %v207
    %266 = vmatmul.f32.gmra.mxu0 %v246
    %v267 = vpop.f32.mrf.mxu0
    %v268 = vadd.f32 0.0, %v267
    %269 = vdwg.mxu0
    %v270 = vadd.f32 %v249, %v268
    %v271 = vtanh.pop %v270
    %272 = vst [vmem:[%s248] sm:$0xff] %v271
    %s273 = scalar_lea.vmem [#allocation3], 16
    %v274 = vld [vmem:[%s273] sm:$0xff]
    %275 = vmatpush.msra.mxu0 %v222
    %276 = vmatpush.msra.mxu0 %v221
    %277 = vmatpush.msra.mxu0 %v220
    %278 = vmatpush.msra.mxu0 %v219
    %279 = vmatpush.msra.mxu0 %v218
    %280 = vmatpush.msra.mxu0 %v217
    %281 = vmatpush.msra.mxu0 %v216
    %282 = vmatpush.msra.mxu0 %v215
    %283 = vmatpush.msra.mxu0 %v214
    %284 = vmatpush.msra.mxu0 %v213
    %285 = vmatpush.msra.mxu0 %v212
    %286 = vmatpush.msra.mxu0 %v211
    %287 = vmatpush.msra.mxu0 %v210
    %288 = vmatpush.msra.mxu0 %v209
    %289 = vmatpush.msra.mxu0 %v208
    %290 = vmatpush.msra.mxu0 %v207
    %291 = vmatmul.f32.gmra.mxu0 %v271
    %v292 = vpop.f32.mrf.mxu0
    %v293 = vadd.f32 0.0, %v292
    %294 = vdwg.mxu0
    %v295 = vadd.f32 %v274, %v293
    %v296 = vtanh.pop %v295
    %297 = vst [vmem:[%s273] sm:$0xff] %v296
    %s298 = scalar_lea.vmem [#allocation3], 24
    %v299 = vld [vmem:[%s298] sm:$0xff]
    %300 = vmatpush.msra.mxu0 %v222
    %301 = vmatpush.msra.mxu0 %v221
    %302 = vmatpush.msra.mxu0 %v220
    %303 = vmatpush.msra.mxu0 %v219
    %304 = vmatpush.msra.mxu0 %v218
    %305 = vmatpush.msra.mxu0 %v217
    %306 = vmatpush.msra.mxu0 %v216
    %307 = vmatpush.msra.mxu0 %v215
    %308 = vmatpush.msra.mxu0 %v214
    %309 = vmatpush.msra.mxu0 %v213
    %310 = vmatpush.msra.mxu0 %v212
    %311 = vmatpush.msra.mxu0 %v211
    %312 = vmatpush.msra.mxu0 %v210
    %313 = vmatpush.msra.mxu0 %v209
    %314 = vmatpush.msra.mxu0 %v208
    %315 = vmatpush.msra.mxu0 %v207
    %316 = vmatmul.f32.gmra.mxu0 %v296
    %v317 = vpop.f32.mrf.mxu0
    %v318 = vadd.f32 0.0, %v317
    %319 = vdwg.mxu0
    %v320 = vadd.f32 %v299, %v318
    %v321 = vtanh.pop %v320
    %322 = vst [vmem:[%s298] sm:$0xff] %v321
    %s323 = scalar_lea.vmem [#allocation3], 32
    %v324 = vld [vmem:[%s323] sm:$0xff]
    %325 = vmatpush.msra.mxu0 %v222
    %326 = vmatpush.msra.mxu0 %v221
    %327 = vmatpush.msra.mxu0 %v220
    %328 = vmatpush.msra.mxu0 %v219
    %329 = vmatpush.msra.mxu0 %v218
    %330 = vmatpush.msra.mxu0 %v217
    %331 = vmatpush.msra.mxu0 %v216
    %332 = vmatpush.msra.mxu0 %v215
    %333 = vmatpush.msra.mxu0 %v214
    %334 = vmatpush.msra.mxu0 %v213
    %335 = vmatpush.msra.mxu0 %v212
    %336 = vmatpush.msra.mxu0 %v211
    %337 = vmatpush.msra.mxu0 %v210
    %338 = vmatpush.msra.mxu0 %v209
    %339 = vmatpush.msra.mxu0 %v208
    %340 = vmatpush.msra.mxu0 %v207
    %341 = vmatmul.f32.gmra.mxu0 %v321
    %v342 = vpop.f32.mrf.mxu0
    %v343 = vadd.f32 0.0, %v342
    %344 = vdwg.mxu0
    %v345 = vadd.f32 %v324, %v343
    %v346 = vtanh.pop %v345
    %347 = vst [vmem:[%s323] sm:$0xff] %v346
    %s348 = scalar_lea.vmem [#allocation3], 40
    %v349 = vld [vmem:[%s348] sm:$0xff]
    %350 = vmatpush.msra.mxu0 %v222
    %351 = vmatpush.msra.mxu0 %v221
    %352 = vmatpush.msra.mxu0 %v220
    %353 = vmatpush.msra.mxu0 %v219
    %354 = vmatpush.msra.mxu0 %v218
    %355 = vmatpush.msra.mxu0 %v217
    %356 = vmatpush.msra.mxu0 %v216
    %357 = vmatpush.msra.mxu0 %v215
    %358 = vmatpush.msra.mxu0 %v214
    %359 = vmatpush.msra.mxu0 %v213
    %360 = vmatpush.msra.mxu0 %v212
    %361 = vmatpush.msra.mxu0 %v211
    %362 = vmatpush.msra.mxu0 %v210
    %363 = vmatpush.msra.mxu0 %v209
    %364 = vmatpush.msra.mxu0 %v208
    %365 = vmatpush.msra.mxu0 %v207
    %366 = vmatmul.f32.gmra.mxu0 %v346
    %v367 = vpop.f32.mrf.mxu0
    %v368 = vadd.f32 0.0, %v367
    %369 = vdwg.mxu0
    %v370 = vadd.f32 %v349, %v368
    %v371 = vtanh.pop %v370
    %372 = vst [vmem:[%s348] sm:$0xff] %v371
    %s373 = scalar_lea.vmem [#allocation3], 48
    %v374 = vld [vmem:[%s373] sm:$0xff]
    %375 = vmatpush.msra.mxu0 %v222
    %376 = vmatpush.msra.mxu0 %v221
    %377 = vmatpush.msra.mxu0 %v220
    %378 = vmatpush.msra.mxu0 %v219
    %379 = vmatpush.msra.mxu0 %v218
    %380 = vmatpush.msra.mxu0 %v217
    %381 = vmatpush.msra.mxu0 %v216
    %382 = vmatpush.msra.mxu0 %v215
    %383 = vmatpush.msra.mxu0 %v214
    %384 = vmatpush.msra.mxu0 %v213
    %385 = vmatpush.msra.mxu0 %v212
    %386 = vmatpush.msra.mxu0 %v211
    %387 = vmatpush.msra.mxu0 %v210
    %388 = vmatpush.msra.mxu0 %v209
    %389 = vmatpush.msra.mxu0 %v208
    %390 = vmatpush.msra.mxu0 %v207
    %391 = vmatmul.f32.gmra.mxu0 %v371
    %v392 = vpop.f32.mrf.mxu0
    %v393 = vadd.f32 0.0, %v392
    %394 = vdwg.mxu0
    %v395 = vadd.f32 %v374, %v393
    %v396 = vtanh.pop %v395
    %397 = vst [vmem:[%s373] sm:$0xff] %v396
    %s398 = scalar_lea.vmem [#allocation3], 56
    %v399 = vld [vmem:[%s398] sm:$0xff]
    %400 = vmatpush.msra.mxu0 %v222
    %401 = vmatpush.msra.mxu0 %v221
    %402 = vmatpush.msra.mxu0 %v220
    %403 = vmatpush.msra.mxu0 %v219
    %404 = vmatpush.msra.mxu0 %v218
    %405 = vmatpush.msra.mxu0 %v217
    %406 = vmatpush.msra.mxu0 %v216
    %407 = vmatpush.msra.mxu0 %v215
    %408 = vmatpush.msra.mxu0 %v214
    %409 = vmatpush.msra.mxu0 %v213
    %410 = vmatpush.msra.mxu0 %v212
    %411 = vmatpush.msra.mxu0 %v211
    %412 = vmatpush.msra.mxu0 %v210
    %413 = vmatpush.msra.mxu0 %v209
    %414 = vmatpush.msra.mxu0 %v208
    %415 = vmatpush.msra.mxu0 %v207
    %416 = vmatmul.f32.gmra.mxu0 %v396
    %v417 = vpop.f32.mrf.mxu0
    %v418 = vadd.f32 0.0, %v417
    %419 = vdwg.mxu0
    %v420 = vadd.f32 %v399, %v418
    %v421 = vtanh.pop %v420
    %422 = vst [vmem:[%s398] sm:$0xff] %v421
    %423 = vst [vmem:[#allocation2] sm:$0xff] %v421
    %v424 = vld [vmem:[#allocation3] sm:$0xff]
    %v425 = vld [vmem:[#allocation3 + $0x8] sm:$0xff]
    %v426 = vld [vmem:[#allocation3 + $0x10] sm:$0xff]
    %v427 = vld [vmem:[#allocation3 + $0x18] sm:$0xff]
    %v428 = vld [vmem:[#allocation3 + $0x20] sm:$0xff]
    %v429 = vld [vmem:[#allocation3 + $0x28] sm:$0xff]
    %v430 = vld [vmem:[#allocation3 + $0x30] sm:$0xff]
    %v431 = vld [vmem:[#allocation3 + $0x38] sm:$0xff]
    %v432 = vpack.c.bf16 %v424, %v424
    %v433 = vpack.c.bf16 %v425, %v425
    %v434 = vpack.c.bf16 %v426, %v426
    %v435 = vpack.c.bf16 %v427, %v427
    %v436 = vpack.c.bf16 %v428, %v428
    %v437 = vpack.c.bf16 %v429, %v429
    %v438 = vpack.c.bf16 %v430, %v430
    %v439 = vpack.c.bf16 %v431, %v431
    %440 = vst [vmem:[#allocation10] sm:$0xf] %v432
    %441 = vst [vmem:[#allocation10 + $0x4] sm:$0xf] %v433
    %442 = vst [vmem:[#allocation10 + $0x8] sm:$0xf] %v434
    %443 = vst [vmem:[#allocation10 + $0xc] sm:$0xf] %v435
    %444 = vst [vmem:[#allocation10 + $0x10] sm:$0xf] %v436
    %445 = vst [vmem:[#allocation10 + $0x14] sm:$0xf] %v437
    %446 = vst [vmem:[#allocation10 + $0x18] sm:$0xf] %v438
    %447 = vst [vmem:[#allocation10 + $0x1c] sm:$0xf] %v439
    // Predicated region
    $region34: #{tpu_custom_call.1} parent=1 // pred_check
      _
    $region35: #{tpu_custom_call.1} parent=1 // pred_check_branch
      %449 = sbr.rel (0) target = $region37
    $region36: #{tpu_custom_call.1} parent=1 // pred_region
      %451 = vsyncadd [#allocation6], 0
      %s452 = sshll.u32 [#allocation10], 4
      %s453 = int_to_ptr.vmem [resolvable:$true] %s452
      %s454 = sshll.u32 %s4, 4
      %s455 = int_to_ptr.hbm [resolvable:$true] %s454
      %460 = dma.vmem_to_hbm [thread:$0]  %s453, 512, %s455, [#allocation6], 64, 64, 4
    $region37: #{tpu_custom_call.1} parent=1 // pred_fallthru
      _
    // Predicated region
    $region38: #{tpu_custom_call.1} parent=1 // pred_check
      _
    $region39: #{tpu_custom_call.1} parent=1 // pred_check_branch
      %462 = sbr.rel (0) target = $region41
    $region40: #{tpu_custom_call.1} parent=1 // pred_region
      %464 = dma.done [#allocation6], 512
    $region41: #{tpu_custom_call.1} parent=1 // pred_fallthru
      _
    %465 = vsyncpa [#allocation5], 1
    %466 = vsyncpa [#allocation8], 1
    %467 = vsyncpa [#allocation6], 1

// kernel: tpu_custom_call.1
$region0: #{tpu_custom_call.1}
  #allocation0 [shape = 'u32[]', space=smem, size = 0x4, offset = 0x4, fixed_abs, tag = 'smem constant byte address 0x4 - core index']
  #allocation1 [shape = 'u32[72,128]{1,0:T(1,128)}', space=vmem, size = 0x9000, scoped, tag = 'internal scratch']
  #allocation2 [shape = 'f32[8,128]{1,0:T(8,128)}', space=vmem, size = 0x1000, scoped, tag = 'scratch operand']
  #allocation3 [shape = 'f32[64,128]{1,0:T(8,128)}', space=vmem, size = 0x8000, scoped, tag = 'scratch operand']
  %s0 = inlined_call_operand.hbm [shape: bf16[64,128], index: 0, kind: input, shape index: {}]
  %s1 = inlined_call_operand.hbm [shape: bf16[128,128], index: 1, kind: input, shape index: {}]
  %s2 = inlined_call_operand.hbm [shape: f32[128,128], index: 2, kind: input, shape index: {}]
  %s3 = inlined_call_operand.vmem [shape: f32[1,128], index: 3, kind: input, shape index: {}]
  %s4 = inlined_call_operand.hbm [shape: bf16[64,128], index: 4, kind: output, shape index: {}]
  %s5 = sld [smem:[#allocation0]]
  $region42: #{tpu_custom_call.1} parent=0
    _
  %s7 = ssub.s32 1, %s5
  %s8 = scalar_select 0, %s7, %s5
  $region1: #{tpu_custom_call.1} parent=0
    #allocation4 [shape = 'u8[16384]{0}', space=vmem, size = 0x4000, scoped, tag = 'input window, operand 0, single buffered']
    #allocation5 [shape = 's32[1]{0}', space=sflag, size = 0x4, scoped, tag = 'scoped memory for tpu_custom_call.1']
    #allocation6 [shape = 's32[1]{0}', space=sflag, size = 0x4, scoped, tag = 'scoped memory for tpu_custom_call.1']
    #allocation7 [shape = 'u8[32768]{0}', space=vmem, size = 0x8000, scoped, tag = 'input window, operand 1, single buffered']
    #allocation8 [shape = 's32[1]{0}', space=sflag, size = 0x4, scoped, tag = 'scoped memory for tpu_custom_call.1']
    #allocation9 [shape = 'u8[65536]{0}', space=vmem, size = 0x10000, scoped, tag = 'input window, operand 2, single buffered']
    #allocation10 [shape = 'u8[16384]{0}', space=vmem, size = 0x4000, scoped, tag = 'output window, operand 0, single buffered']
    %9 = vsyncpa [#allocation5], 0
    %10 = vsyncpa [#allocation8], 0
    %11 = vsyncpa [#allocation6], 0
    // Predicated region
    $region2: #{tpu_custom_call.1} parent=1 // pred_check
      _
    $region3: #{tpu_custom_call.1} parent=1 // pred_check_branch
      %13 = sbr.rel (0) target = $region5
    $region4: #{tpu_custom_call.1} parent=1 // pred_region
      %15 = vsyncadd [#allocation5], 0
      %s16 = sshll.u32 %s0, 4
      %s17 = int_to_ptr.hbm [resolvable:$true] %s16
      %s18 = sshll.u32 [#allocation4], 4
      %s19 = int_to_ptr.vmem [resolvable:$true] %s18
      %24 = dma.hbm_to_vmem [thread:$0]  %s17, 512, %s19, [#allocation5], 64, 64, 4
    $region5: #{tpu_custom_call.1} parent=1 // pred_fallthru
      _
    // Predicated region
    $region6: #{tpu_custom_call.1} parent=1 // pred_check
      _
    $region7: #{tpu_custom_call.1} parent=1 // pred_check_branch
      %26 = sbr.rel (0) target = $region9
    $region8: #{tpu_custom_call.1} parent=1 // pred_region
      %28 = vsyncadd [#allocation8], 0
      %s29 = sshll.u32 %s1, 4
      %s30 = int_to_ptr.hbm [resolvable:$true] %s29
      %s31 = sshll.u32 [#allocation7], 4
      %s32 = int_to_ptr.vmem [resolvable:$true] %s31
      %37 = dma.hbm_to_vmem [thread:$0]  %s30, 1024, %s32, [#allocation8], 64, 64, 4
    $region9: #{tpu_custom_call.1} parent=1 // pred_fallthru
      _
    // Predicated region
    $region10: #{tpu_custom_call.1} parent=1 // pred_check
      _
    $region11: #{tpu_custom_call.1} parent=1 // pred_check_branch
      %39 = sbr.rel (0) target = $region13
    $region12: #{tpu_custom_call.1} parent=1 // pred_region
      %41 = vsyncadd [#allocation8], 0
      %s42 = sshll.u32 %s2, 4
      %s43 = int_to_ptr.hbm [resolvable:$true] %s42
      %s44 = sshll.u32 [#allocation9], 4
      %s45 = int_to_ptr.vmem [resolvable:$true] %s44
      %50 = dma.hbm_to_vmem [thread:$0]  %s43, 2048, %s45, [#allocation8], 128, 128, 8
    $region13: #{tpu_custom_call.1} parent=1 // pred_fallthru
      _
    // Predicated region
    $region14: #{tpu_custom_call.1} parent=1 // pred_check
      _
    $region15: #{tpu_custom_call.1} parent=1 // pred_check_branch
      %52 = sbr.rel (0) target = $region17
    $region16: #{tpu_custom_call.1} parent=1 // pred_region
      _
    $region17: #{tpu_custom_call.1} parent=1 // pred_fallthru
      _
    // Predicated region
    $region18: #{tpu_custom_call.1} parent=1 // pred_check
      _
    $region19: #{tpu_custom_call.1} parent=1 // pred_check_branch
      %54 = sbr.rel (0) target = $region21
    $region20: #{tpu_custom_call.1} parent=1 // pred_region
      %56 = dma.done [#allocation5], 512
    $region21: #{tpu_custom_call.1} parent=1 // pred_fallthru
      _
    // Predicated region
    $region22: #{tpu_custom_call.1} parent=1 // pred_check
      _
    $region23: #{tpu_custom_call.1} parent=1 // pred_check_branch
      %58 = sbr.rel (0) target = $region25
    $region24: #{tpu_custom_call.1} parent=1 // pred_region
      %60 = dma.done [#allocation8], 1024
    $region25: #{tpu_custom_call.1} parent=1 // pred_fallthru
      _
    // Predicated region
    $region26: #{tpu_custom_call.1} parent=1 // pred_check
      _
    $region27: #{tpu_custom_call.1} parent=1 // pred_check_branch
      %62 = sbr.rel (0) target = $region29
    $region28: #{tpu_custom_call.1} parent=1 // pred_region
      %64 = dma.done [#allocation8], 2048
    $region29: #{tpu_custom_call.1} parent=1 // pred_fallthru
      _
    %p65 = scmp.eq.s32.totalorder 0, 0
    // Predicated region
    $region30: #{tpu_custom_call.1} parent=1 // pred_check
      %p66 = pneg %p65
    $region31: #{tpu_custom_call.1} parent=1 // pred_check_branch
      %68 = sbr.rel (%p66) target = $region33
    $region32: #{tpu_custom_call.1} parent=1 // pred_region
      %69 = vst [vmem:[#allocation2] sm:$0xff] 0.0
    $region33: #{tpu_custom_call.1} parent=1 // pred_fallthru
      _
    %v70 = vld [vmem:[#allocation4] sm:$0xf]
    %v71 = vld [vmem:[#allocation4 + $0x4] sm:$0xf]
    %v72 = vld [vmem:[#allocation4 + $0x8] sm:$0xf]
    %v73 = vld [vmem:[#allocation4 + $0xc] sm:$0xf]
    %v74 = vld [vmem:[#allocation4 + $0x10] sm:$0xf]
    %v75 = vld [vmem:[#allocation4 + $0x14] sm:$0xf]
    %v76 = vld [vmem:[#allocation4 + $0x18] sm:$0xf]
    %v77 = vld [vmem:[#allocation4 + $0x1c] sm:$0xf]
    %v78 = vld [vmem:[#allocation7] sm:$0xf]
    %v79 = vld [vmem:[#allocation7 + $0x4] sm:$0xf]
    %v80 = vld [vmem:[#allocation7 + $0x8] sm:$0xf]
    %v81 = vld [vmem:[#allocation7 + $0xc] sm:$0xf]
    %v82 = vld [vmem:[#allocation7 + $0x10] sm:$0xf]
    %v83 = vld [vmem:[#allocation7 + $0x14] sm:$0xf]
    %v84 = vld [vmem:[#allocation7 + $0x18] sm:$0xf]
    %v85 = vld [vmem:[#allocation7 + $0x1c] sm:$0xf]
    %v86 = vld [vmem:[#allocation7 + $0x20] sm:$0xf]
    %v87 = vld [vmem:[#allocation7 + $0x24] sm:$0xf]
    %v88 = vld [vmem:[#allocation7 + $0x28] sm:$0xf]
    %v89 = vld [vmem:[#allocation7 + $0x2c] sm:$0xf]
    %v90 = vld [vmem:[#allocation7 + $0x30] sm:$0xf]
    %v91 = vld [vmem:[#allocation7 + $0x34] sm:$0xf]
    %v92 = vld [vmem:[#allocation7 + $0x38] sm:$0xf]
    %v93 = vld [vmem:[#allocation7 + $0x3c] sm:$0xf]
    %v94 = vld [vmem:[%s3] sm:$0x1]
    %v96 = vperm.slane %v94, 0
    %v106 = vunpack.c.l.b16 %v70
    %v107 = vunpack.c.l.b16 %v71
    %v108 = vunpack.c.l.b16 %v72
    %v109 = vunpack.c.l.b16 %v73
    %v110 = vunpack.c.l.b16 %v74
    %v111 = vunpack.c.l.b16 %v75
    %v112 = vunpack.c.l.b16 %v76
    %v113 = vunpack.c.l.b16 %v77
    %v114 = vpack.c.b16 %v107, %v106
    %v115 = vpack.c.b16 %v109, %v108
    %v116 = vpack.c.b16 %v111, %v110
    %v117 = vpack.c.b16 %v113, %v112
    %v138 = vunpack.c.l.b16 %v78
    %v139 = vunpack.c.l.b16 %v79
    %v140 = vunpack.c.l.b16 %v80
    %v141 = vunpack.c.l.b16 %v81
    %v142 = vunpack.c.l.b16 %v82
    %v143 = vunpack.c.l.b16 %v83
    %v144 = vunpack.c.l.b16 %v84
    %v145 = vunpack.c.l.b16 %v85
    %v146 = vunpack.c.l.b16 %v86
    %v147 = vunpack.c.l.b16 %v87
    %v148 = vunpack.c.l.b16 %v88
    %v149 = vunpack.c.l.b16 %v89
    %v150 = vunpack.c.l.b16 %v90
    %v151 = vunpack.c.l.b16 %v91
    %v152 = vunpack.c.l.b16 %v92
    %v153 = vunpack.c.l.b16 %v93
    %v154 = vpack.c.b16 %v139, %v138
    %v155 = vpack.c.b16 %v141, %v140
    %v156 = vpack.c.b16 %v143, %v142
    %v157 = vpack.c.b16 %v145, %v144
    %v158 = vpack.c.b16 %v147, %v146
    %v159 = vpack.c.b16 %v149, %v148
    %v160 = vpack.c.b16 %v151, %v150
    %v161 = vpack.c.b16 %v153, %v152
    %170 = vmatpush.bf16.msra.mxu0 %v161
    %171 = vmatpush.bf16.msra.mxu0 %v160
    %172 = vmatpush.bf16.msra.mxu0 %v159
    %173 = vmatpush.bf16.msra.mxu0 %v158
    %174 = vmatpush.bf16.msra.mxu0 %v157
    %175 = vmatpush.bf16.msra.mxu0 %v156
    %176 = vmatpush.bf16.msra.mxu0 %v155
    %177 = vmatpush.bf16.msra.mxu0 %v154
    %178 = vmatmul.bf16.gmra.mxu0 %v114
    %v179 = vpop.f32.mrf.mxu0
    %v180 = vadd.f32 %v96, %v179
    %v181 = vpop.f32.mrf.mxu0
    %v182 = vadd.f32 %v96, %v181
    %183 = vmatmul.bf16.gmra.mxu0 %v115
    %v184 = vpop.f32.mrf.mxu0
    %v185 = vadd.f32 %v96, %v184
    %v186 = vpop.f32.mrf.mxu0
    %v187 = vadd.f32 %v96, %v186
    %188 = vmatmul.bf16.gmra.mxu0 %v116
    %v189 = vpop.f32.mrf.mxu0
    %v190 = vadd.f32 %v96, %v189
    %v191 = vpop.f32.mrf.mxu0
    %v192 = vadd.f32 %v96, %v191
    %193 = vmatmul.bf16.gmra.mxu0 %v117
    %v194 = vpop.f32.mrf.mxu0
    %v195 = vadd.f32 %v96, %v194
    %v196 = vpop.f32.mrf.mxu0
    %v197 = vadd.f32 %v96, %v196
    %198 = vdwg.mxu0
    %199 = vst [vmem:[#allocation3] sm:$0xff] %v180
    %200 = vst [vmem:[#allocation3 + $0x8] sm:$0xff] %v182
    %201 = vst [vmem:[#allocation3 + $0x10] sm:$0xff] %v185
    %202 = vst [vmem:[#allocation3 + $0x18] sm:$0xff] %v187
    %203 = vst [vmem:[#allocation3 + $0x20] sm:$0xff] %v190
    %204 = vst [vmem:[#allocation3 + $0x28] sm:$0xff] %v192
    %205 = vst [vmem:[#allocation3 + $0x30] sm:$0xff] %v195
    %206 = vst [vmem:[#allocation3 + $0x38] sm:$0xff] %v197
    %v207 = vld [vmem:[#allocation9] sm:$0xff]
    %v208 = vld [vmem:[#allocation9 + $0x8] sm:$0xff]
    %v209 = vld [vmem:[#allocation9 + $0x10] sm:$0xff]
    %v210 = vld [vmem:[#allocation9 + $0x18] sm:$0xff]
    %v211 = vld [vmem:[#allocation9 + $0x20] sm:$0xff]
    %v212 = vld [vmem:[#allocation9 + $0x28] sm:$0xff]
    %v213 = vld [vmem:[#allocation9 + $0x30] sm:$0xff]
    %v214 = vld [vmem:[#allocation9 + $0x38] sm:$0xff]
    %v215 = vld [vmem:[#allocation9 + $0x40] sm:$0xff]
    %v216 = vld [vmem:[#allocation9 + $0x48] sm:$0xff]
    %v217 = vld [vmem:[#allocation9 + $0x50] sm:$0xff]
    %v218 = vld [vmem:[#allocation9 + $0x58] sm:$0xff]
    %v219 = vld [vmem:[#allocation9 + $0x60] sm:$0xff]
    %v220 = vld [vmem:[#allocation9 + $0x68] sm:$0xff]
    %v221 = vld [vmem:[#allocation9 + $0x70] sm:$0xff]
    %v222 = vld [vmem:[#allocation9 + $0x78] sm:$0xff]
    %v223 = vld [vmem:[#allocation2] sm:$0xff]
    %v224 = vld [vmem:[#allocation3] sm:$0xff]
    %225 = vmatpush.msra.mxu0 %v222
    %226 = vmatpush.msra.mxu0 %v221
    %227 = vmatpush.msra.mxu0 %v220
    %228 = vmatpush.msra.mxu0 %v219
    %229 = vmatpush.msra.mxu0 %v218
    %230 = vmatpush.msra.mxu0 %v217
    %231 = vmatpush.msra.mxu0 %v216
    %232 = vmatpush.msra.mxu0 %v215
    %233 = vmatpush.msra.mxu0 %v214
    %234 = vmatpush.msra.mxu0 %v213
    %235 = vmatpush.msra.mxu0 %v212
    %236 = vmatpush.msra.mxu0 %v211
    %237 = vmatpush.msra.mxu0 %v210
    %238 = vmatpush.msra.mxu0 %v209
    %239 = vmatpush.msra.mxu0 %v208
    %240 = vmatpush.msra.mxu0 %v207
    %241 = vmatmul.f32.gmra.mxu0 %v223
    %v242 = vpop.f32.mrf.mxu0
    %v243 = vadd.f32 0.0, %v242
    %244 = vdwg.mxu0
    %v245 = vadd.f32 %v224, %v243
    %v246 = vtanh.pop %v245
    %247 = vst [vmem:[#allocation3] sm:$0xff] %v246
    %s248 = scalar_lea.vmem [#allocation3], 8
    %v249 = vld [vmem:[%s248] sm:$0xff]
    %250 = vmatpush.msra.mxu0 %v222
    %251 = vmatpush.msra.mxu0 %v221
    %252 = vmatpush.msra.mxu0 %v220
    %253 = vmatpush.msra.mxu0 %v219
    %254 = vmatpush.msra.mxu0 %v218
    %255 = vmatpush.msra.mxu0 %v217
    %256 = vmatpush.msra.mxu0 %v216
    %257 = vmatpush.msra.mxu0 %v215
    %258 = vmatpush.msra.mxu0 %v214
    %259 = vmatpush.msra.mxu0 %v213
    %260 = vmatpush.msra.mxu0 %v212
    %261 = vmatpush.msra.mxu0 %v211
    %262 = vmatpush.msra.mxu0 %v210
    %263 = vmatpush.msra.mxu0 %v209
    %264 = vmatpush.msra.mxu0 %v208
    %265 = vmatpush.msra.mxu0 %v207
    %266 = vmatmul.f32.gmra.mxu0 %v246
    %v267 = vpop.f32.mrf.mxu0
    %v268 = vadd.f32 0.0, %v267
    %269 = vdwg.mxu0
    %v270 = vadd.f32 %v249, %v268
    %v271 = vtanh.pop %v270
    %272 = vst [vmem:[%s248] sm:$0xff] %v271
    %s273 = scalar_lea.vmem [#allocation3], 16
    %v274 = vld [vmem:[%s273] sm:$0xff]
    %275 = vmatpush.msra.mxu0 %v222
    %276 = vmatpush.msra.mxu0 %v221
    %277 = vmatpush.msra.mxu0 %v220
    %278 = vmatpush.msra.mxu0 %v219
    %279 = vmatpush.msra.mxu0 %v218
    %280 = vmatpush.msra.mxu0 %v217
    %281 = vmatpush.msra.mxu0 %v216
    %282 = vmatpush.msra.mxu0 %v215
    %283 = vmatpush.msra.mxu0 %v214
    %284 = vmatpush.msra.mxu0 %v213
    %285 = vmatpush.msra.mxu0 %v212
    %286 = vmatpush.msra.mxu0 %v211
    %287 = vmatpush.msra.mxu0 %v210
    %288 = vmatpush.msra.mxu0 %v209
    %289 = vmatpush.msra.mxu0 %v208
    %290 = vmatpush.msra.mxu0 %v207
    %291 = vmatmul.f32.gmra.mxu0 %v271
    %v292 = vpop.f32.mrf.mxu0
    %v293 = vadd.f32 0.0, %v292
    %294 = vdwg.mxu0
    %v295 = vadd.f32 %v274, %v293
    %v296 = vtanh.pop %v295
    %297 = vst [vmem:[%s273] sm:$0xff] %v296
    %s298 = scalar_lea.vmem [#allocation3], 24
    %v299 = vld [vmem:[%s298] sm:$0xff]
    %300 = vmatpush.msra.mxu0 %v222
    %301 = vmatpush.msra.mxu0 %v221
    %302 = vmatpush.msra.mxu0 %v220
    %303 = vmatpush.msra.mxu0 %v219
    %304 = vmatpush.msra.mxu0 %v218
    %305 = vmatpush.msra.mxu0 %v217
    %306 = vmatpush.msra.mxu0 %v216
    %307 = vmatpush.msra.mxu0 %v215
    %308 = vmatpush.msra.mxu0 %v214
    %309 = vmatpush.msra.mxu0 %v213
    %310 = vmatpush.msra.mxu0 %v212
    %311 = vmatpush.msra.mxu0 %v211
    %312 = vmatpush.msra.mxu0 %v210
    %313 = vmatpush.msra.mxu0 %v209
    %314 = vmatpush.msra.mxu0 %v208
    %315 = vmatpush.msra.mxu0 %v207
    %316 = vmatmul.f32.gmra.mxu0 %v296
    %v317 = vpop.f32.mrf.mxu0
    %v318 = vadd.f32 0.0, %v317
    %319 = vdwg.mxu0
    %v320 = vadd.f32 %v299, %v318
    %v321 = vtanh.pop %v320
    %322 = vst [vmem:[%s298] sm:$0xff] %v321
    %s323 = scalar_lea.vmem [#allocation3], 32
    %v324 = vld [vmem:[%s323] sm:$0xff]
    %325 = vmatpush.msra.mxu0 %v222
    %326 = vmatpush.msra.mxu0 %v221
    %327 = vmatpush.msra.mxu0 %v220
    %328 = vmatpush.msra.mxu0 %v219
    %329 = vmatpush.msra.mxu0 %v218
    %330 = vmatpush.msra.mxu0 %v217
    %331 = vmatpush.msra.mxu0 %v216
    %332 = vmatpush.msra.mxu0 %v215
    %333 = vmatpush.msra.mxu0 %v214
    %334 = vmatpush.msra.mxu0 %v213
    %335 = vmatpush.msra.mxu0 %v212
    %336 = vmatpush.msra.mxu0 %v211
    %337 = vmatpush.msra.mxu0 %v210
    %338 = vmatpush.msra.mxu0 %v209
    %339 = vmatpush.msra.mxu0 %v208
    %340 = vmatpush.msra.mxu0 %v207
    %341 = vmatmul.f32.gmra.mxu0 %v321
    %v342 = vpop.f32.mrf.mxu0
    %v343 = vadd.f32 0.0, %v342
    %344 = vdwg.mxu0
    %v345 = vadd.f32 %v324, %v343
    %v346 = vtanh.pop %v345
    %347 = vst [vmem:[%s323] sm:$0xff] %v346
    %s348 = scalar_lea.vmem [#allocation3], 40
    %v349 = vld [vmem:[%s348] sm:$0xff]
    %350 = vmatpush.msra.mxu0 %v222
    %351 = vmatpush.msra.mxu0 %v221
    %352 = vmatpush.msra.mxu0 %v220
    %353 = vmatpush.msra.mxu0 %v219
    %354 = vmatpush.msra.mxu0 %v218
    %355 = vmatpush.msra.mxu0 %v217
    %356 = vmatpush.msra.mxu0 %v216
    %357 = vmatpush.msra.mxu0 %v215
    %358 = vmatpush.msra.mxu0 %v214
    %359 = vmatpush.msra.mxu0 %v213
    %360 = vmatpush.msra.mxu0 %v212
    %361 = vmatpush.msra.mxu0 %v211
    %362 = vmatpush.msra.mxu0 %v210
    %363 = vmatpush.msra.mxu0 %v209
    %364 = vmatpush.msra.mxu0 %v208
    %365 = vmatpush.msra.mxu0 %v207
    %366 = vmatmul.f32.gmra.mxu0 %v346
    %v367 = vpop.f32.mrf.mxu0
    %v368 = vadd.f32 0.0, %v367
    %369 = vdwg.mxu0
    %v370 = vadd.f32 %v349, %v368
    %v371 = vtanh.pop %v370
    %372 = vst [vmem:[%s348] sm:$0xff] %v371
    %s373 = scalar_lea.vmem [#allocation3], 48
    %v374 = vld [vmem:[%s373] sm:$0xff]
    %375 = vmatpush.msra.mxu0 %v222
    %376 = vmatpush.msra.mxu0 %v221
    %377 = vmatpush.msra.mxu0 %v220
    %378 = vmatpush.msra.mxu0 %v219
    %379 = vmatpush.msra.mxu0 %v218
    %380 = vmatpush.msra.mxu0 %v217
    %381 = vmatpush.msra.mxu0 %v216
    %382 = vmatpush.msra.mxu0 %v215
    %383 = vmatpush.msra.mxu0 %v214
    %384 = vmatpush.msra.mxu0 %v213
    %385 = vmatpush.msra.mxu0 %v212
    %386 = vmatpush.msra.mxu0 %v211
    %387 = vmatpush.msra.mxu0 %v210
    %388 = vmatpush.msra.mxu0 %v209
    %389 = vmatpush.msra.mxu0 %v208
    %390 = vmatpush.msra.mxu0 %v207
    %391 = vmatmul.f32.gmra.mxu0 %v371
    %v392 = vpop.f32.mrf.mxu0
    %v393 = vadd.f32 0.0, %v392
    %394 = vdwg.mxu0
    %v395 = vadd.f32 %v374, %v393
    %v396 = vtanh.pop %v395
    %397 = vst [vmem:[%s373] sm:$0xff] %v396
    %s398 = scalar_lea.vmem [#allocation3], 56
    %v399 = vld [vmem:[%s398] sm:$0xff]
    %400 = vmatpush.msra.mxu0 %v222
    %401 = vmatpush.msra.mxu0 %v221
    %402 = vmatpush.msra.mxu0 %v220
    %403 = vmatpush.msra.mxu0 %v219
    %404 = vmatpush.msra.mxu0 %v218
    %405 = vmatpush.msra.mxu0 %v217
    %406 = vmatpush.msra.mxu0 %v216
    %407 = vmatpush.msra.mxu0 %v215
    %408 = vmatpush.msra.mxu0 %v214
    %409 = vmatpush.msra.mxu0 %v213
    %410 = vmatpush.msra.mxu0 %v212
    %411 = vmatpush.msra.mxu0 %v211
    %412 = vmatpush.msra.mxu0 %v210
    %413 = vmatpush.msra.mxu0 %v209
    %414 = vmatpush.msra.mxu0 %v208
    %415 = vmatpush.msra.mxu0 %v207
    %416 = vmatmul.f32.gmra.mxu0 %v396
    %v417 = vpop.f32.mrf.mxu0
    %v418 = vadd.f32 0.0, %v417
    %419 = vdwg.mxu0
    %v420 = vadd.f32 %v399, %v418
    %v421 = vtanh.pop %v420
    %422 = vst [vmem:[%s398] sm:$0xff] %v421
    %423 = vst [vmem:[#allocation2] sm:$0xff] %v421
    %v424 = vld [vmem:[#allocation3] sm:$0xff]
    %v425 = vld [vmem:[#allocation3 + $0x8] sm:$0xff]
    %v426 = vld [vmem:[#allocation3 + $0x10] sm:$0xff]
    %v427 = vld [vmem:[#allocation3 + $0x18] sm:$0xff]
    %v428 = vld [vmem:[#allocation3 + $0x20] sm:$0xff]
    %v429 = vld [vmem:[#allocation3 + $0x28] sm:$0xff]
    %v430 = vld [vmem:[#allocation3 + $0x30] sm:$0xff]
    %v431 = vld [vmem:[#allocation3 + $0x38] sm:$0xff]
    %v432 = vpack.c.bf16 %v424, %v424
    %v433 = vpack.c.bf16 %v425, %v425
    %v434 = vpack.c.bf16 %v426, %v426
    %v435 = vpack.c.bf16 %v427, %v427
    %v436 = vpack.c.bf16 %v428, %v428
    %v437 = vpack.c.bf16 %v429, %v429
    %v438 = vpack.c.bf16 %v430, %v430
    %v439 = vpack.c.bf16 %v431, %v431
    %440 = vst [vmem:[#allocation10] sm:$0xf] %v432
    %441 = vst [vmem:[#allocation10 + $0x4] sm:$0xf] %v433
    %442 = vst [vmem:[#allocation10 + $0x8] sm:$0xf] %v434
    %443 = vst [vmem:[#allocation10 + $0xc] sm:$0xf] %v435
    %444 = vst [vmem:[#allocation10 + $0x10] sm:$0xf] %v436
    %445 = vst [vmem:[#allocation10 + $0x14] sm:$0xf] %v437
    %446 = vst [vmem:[#allocation10 + $0x18] sm:$0xf] %v438
    %447 = vst [vmem:[#allocation10 + $0x1c] sm:$0xf] %v439
    // Predicated region
    $region34: #{tpu_custom_call.1} parent=1 // pred_check
      _
    $region35: #{tpu_custom_call.1} parent=1 // pred_check_branch
      %449 = sbr.rel (0) target = $region37
    $region36: #{tpu_custom_call.1} parent=1 // pred_region
      %451 = vsyncadd [#allocation6], 0
      %s452 = sshll.u32 [#allocation10], 4
      %s453 = int_to_ptr.vmem [resolvable:$true] %s452
      %s454 = sshll.u32 %s4, 4
      %s455 = int_to_ptr.hbm [resolvable:$true] %s454
      %460 = dma.vmem_to_hbm [thread:$0]  %s453, 512, %s455, [#allocation6], 64, 64, 4
    $region37: #{tpu_custom_call.1} parent=1 // pred_fallthru
      _
    // Predicated region
    $region38: #{tpu_custom_call.1} parent=1 // pred_check
      _
    $region39: #{tpu_custom_call.1} parent=1 // pred_check_branch
      %462 = sbr.rel (0) target = $region41
    $region40: #{tpu_custom_call.1} parent=1 // pred_region
      %464 = dma.done [#allocation6], 512
    $region41: #{tpu_custom_call.1} parent=1 // pred_fallthru
      _
    %465 = vsyncpa [#allocation5], 1
    %466 = vsyncpa [#allocation8], 1
    %467 = vsyncpa [#allocation6], 1

</llo_original>
